<compile_context>
chip_gen: v7x
topology: tpu7x:2x2x1
jax: 0.10.0
libtpu: 0.0.40
codegen_flags: <defaults>
</compile_context>

<pallas_src>
import math

import numpy as np
import jax
import jax.numpy as jnp
from jax.experimental import pallas as pl
from jax.experimental.pallas import tpu as pltpu


def _round_up(x: int, m: int) -> int:
    return ((x + m - 1) // m) * m


# ---------------------------------------------------------------------------
# Deterministic "parameter" construction (windowed DFT, mel fbank, DCT matrix)
# ---------------------------------------------------------------------------
def _hann_periodic(win_length: int) -> np.ndarray:
    n = np.arange(win_length, dtype=np.float64)
    return 0.5 - 0.5 * np.cos(2.0 * np.pi * n / win_length)


def _windowed_dft_mats(n_fft: int):
    """(Wc, Ws) with the hann window folded in: real = x @ Wc, imag = -(x @ Ws)."""
    n_freqs = n_fft // 2 + 1
    n = np.arange(n_fft, dtype=np.float64)[:, None]
    k = np.arange(n_freqs, dtype=np.float64)[None, :]
    ang = 2.0 * np.pi * n * k / n_fft
    w = _hann_periodic(n_fft)[:, None]
    wc = (w * np.cos(ang)).astype(np.float32)   # (n_fft, n_freqs)
    ws = (w * np.sin(ang)).astype(np.float32)   # sign irrelevant (squared)
    return wc, ws


def _melscale_fbanks(n_freqs: int, n_mels: int, sample_rate: int,
                     f_min: float = 0.0, f_max: float | None = None) -> np.ndarray:
    """torchaudio.functional.melscale_fbanks, mel_scale='htk', norm=None."""
    if f_max is None:
        f_max = sample_rate / 2.0
    all_freqs = np.linspace(0.0, sample_rate / 2.0, n_freqs)

    def hz_to_mel(f):
        return 2595.0 * np.log10(1.0 + f / 700.0)

    def mel_to_hz(m):
        return 700.0 * (10.0 ** (m / 2595.0) - 1.0)

    m_pts = np.linspace(hz_to_mel(f_min), hz_to_mel(f_max), n_mels + 2)
    f_pts = mel_to_hz(m_pts)
    f_diff = f_pts[1:] - f_pts[:-1]                     # (n_mels + 1,)
    slopes = f_pts[None, :] - all_freqs[:, None]        # (n_freqs, n_mels + 2)
    down = -slopes[:, :-2] / f_diff[:-1]
    up = slopes[:, 2:] / f_diff[1:]
    fb = np.maximum(0.0, np.minimum(down, up))          # (n_freqs, n_mels)
    return fb.astype(np.float32)


def _create_dct(n_mfcc: int, n_mels: int) -> np.ndarray:
    """torchaudio.functional.create_dct(n_mfcc, n_mels, norm='ortho') -> (n_mels, n_mfcc)."""
    n = np.arange(n_mels, dtype=np.float64)
    k = np.arange(n_mfcc, dtype=np.float64)
    dct = np.cos(np.pi / n_mels * (n[:, None] + 0.5) * k[None, :])
    dct[:, 0] *= 1.0 / np.sqrt(2.0)
    dct *= np.sqrt(2.0 / n_mels)
    return dct.astype(np.float32)


# ---------------------------------------------------------------------------
# Pallas kernel: one tile of frames -> lane-dense MFCC block
# ---------------------------------------------------------------------------
def _mfcc_kernel(frames_ref, wcs_ref, fb_ref, dct_ref, out_ref):
    # (TM,512)bf16 @ (512,640)bf16 -> f32; lanes: [real bins 0..256 | pad | imag bins 1..256]
    ri = jnp.dot(frames_ref[...], wcs_ref[...], preferred_element_type=jnp.float32)
    sq = ri * ri                                    # squared real/imag components, per lane
    # fb rows are stacked to match the [real | imag] lane layout, so this one bf16
    # matmul accumulates real^2*fb + imag^2*fb (no explicit add / re-alignment).
    mel = jnp.dot(sq.astype(jnp.bfloat16), fb_ref[...],
                  preferred_element_type=jnp.float32)        # (TM, 128)
    # AmplitudeToDB('power', top_db=None): 10*log10(clamp(x,1e-10)); the 10/ln(10)
    # scale is folded into the DCT matrix offline.
    log_mel = jnp.log(jnp.maximum(mel, 1e-10))
    # Padded DCT rows are zero -> padded mel bins contribute nothing.
    out_ref[...] = jnp.dot(log_mel.astype(jnp.bfloat16), dct_ref[...],
                           preferred_element_type=jnp.float32)


class MFCCsCalculatorPallas:
    TM_MAX = 512  # cap on frame rows per grid step (per-step VMEM stays ~a few MiB)

    def __init__(self, n_mfcc: int = 25, win_length: int = 512,
                 hop_length: int = 160, sample_rate: int = 16000, n_mels: int = 80):
        self.n_mfcc = n_mfcc
        self.win_length = win_length
        self.n_fft = win_length
        self.hop_length = hop_length
        self.sample_rate = sample_rate
        self.n_mels = n_mels
        self.n_freqs = self.n_fft // 2 + 1
        # Lane-aligned (multiple-of-128) padded dimensions
        self.n_freq_pad = _round_up(self.n_freqs, 128)          # 257 -> 384 (real part)
        self.n_imag = self.n_freqs - 1                           # sin(bin 0) == 0 -> dropped
        self.n_imag_pad = _round_up(self.n_imag, 128)            # 256
        self.n_ri = self.n_freq_pad + self.n_imag_pad            # 640 fused DFT width
        self.n_mel_pad = _round_up(n_mels, 128)                  # 80  -> 128
        self.n_out_pad = _round_up(n_mfcc, 128)                  # 25  -> 128 (lane-dense out)

        wc, ws = _windowed_dft_mats(self.n_fft)
        fb = _melscale_fbanks(self.n_freqs, n_mels, sample_rate)
        dct = _create_dct(n_mfcc, n_mels)

        # Fused [Wc | Ws(1..Nyq)] (all-zero sine columns removed), bf16 (MXU-native).
        wcs = np.zeros((self.n_fft, self.n_ri), np.float32)
        wcs[:, :self.n_freqs] = wc
        wcs[:, self.n_freq_pad:self.n_freq_pad + self.n_imag] = ws[:, 1:]
        # Mel filterbank with rows stacked to mirror the [real | imag] lane layout.
        fb_stk = np.zeros((self.n_ri, self.n_mel_pad), np.float32)
        fb_stk[:self.n_freqs, :n_mels] = fb
        fb_stk[self.n_freq_pad:self.n_freq_pad + self.n_imag, :n_mels] = fb[1:, :]
        # DCT with the dB scale folded in; padded mel rows stay exactly zero.
        db_scale = 10.0 / float(np.log(10.0))
        dct_p = np.zeros((self.n_mel_pad, self.n_out_pad), np.float32)
        dct_p[:n_mels, :n_mfcc] = dct * db_scale

        self.wcs = jnp.asarray(wcs, dtype=jnp.bfloat16)    # (512, 640) bf16
        self.fb = jnp.asarray(fb_stk, dtype=jnp.bfloat16)  # (640, 128) bf16
        self.dct = jnp.asarray(dct_p, dtype=jnp.bfloat16)  # (128, 128) bf16

        # unpadded f32 copies for the pure-JAX reference check
        self._wc, self._ws = jnp.asarray(wc), jnp.asarray(ws)
        self._fb, self._dct = jnp.asarray(fb), jnp.asarray(dct)

    # -- adaptive frame-tile size ---------------------------------------------
    def _choose_tm(self, M: int) -> int:
        m16 = _round_up(max(M, 1), 16)
        # Keep >=2 (ideally >=4) grid steps so the 'parallel' axis can shard
        # across both v7x TensorCores; cap the tile at TM_MAX for long audio.
        target_grid = 4 if m16 > 64 else 2
        tm = _round_up(-(-m16 // target_grid), 16)
        return int(min(max(tm, 16), self.TM_MAX))

    # -- framing: strided chunk slices instead of a generic XLA gather --------
    def _frames(self, wav_p: jax.Array, n_frames: int) -> jax.Array:
        B, C, _ = wav_p.shape
        chunk = math.gcd(self.hop_length, self.n_fft)      # 32 for defaults
        if chunk >= 8:
            hop_c = self.hop_length // chunk               # 5
            nfft_c = self.n_fft // chunk                   # 16
            n_chunks = (n_frames - 1) * hop_c + nfft_c
            sig = wav_p[..., : n_chunks * chunk].reshape(B * C, n_chunks, chunk)
            parts = [sig[:, j: j + (n_frames - 1) * hop_c + 1: hop_c, :]
                     for j in range(nfft_c)]               # each (B*C, n_frames, chunk)
            frames = jnp.stack(parts, axis=2)              # (B*C, F, nfft_c, chunk)
        else:  # fallback for odd hop/window combinations
            idx = (jnp.arange(n_frames)[:, None] * self.hop_length
                   + jnp.arange(self.n_fft)[None, :])
            frames = wav_p.reshape(B * C, -1)[:, idx]
        return frames.reshape(B * C * n_frames, self.n_fft)

    def __call__(self, wav: jax.Array) -> jax.Array:
        """wav: (B, C, T) float32  ->  mfcc: (B, C, n_mfcc, n_frames) float32."""
        B, C, T = wav.shape
        pad = (self.win_length - self.hop_length) // 2
        if T <= pad:
            raise ValueError(f"reflect padding of {pad} needs T > {pad}, got T={T}")
        wav_p = jnp.pad(wav, ((0, 0), (0, 0), (pad, pad)), mode="reflect")
        T_p = T + 2 * pad
        n_frames = 1 + (T_p - self.n_fft) // self.hop_length

        frames2d = self._frames(wav_p, n_frames).astype(jnp.bfloat16)
        M = B * C * n_frames
        tm = self._choose_tm(M)
        M_pad = _round_up(M, tm)
        if M_pad != M:
            frames2d = jnp.pad(frames2d, ((0, M_pad - M), (0, 0)))

        out = pl.pallas_call(
            _mfcc_kernel,
            out_shape=jax.ShapeDtypeStruct((M_pad, self.n_out_pad), jnp.float32),
            grid=(M_pad // tm,),
            in_specs=[
                pl.BlockSpec((tm, self.n_fft), lambda i: (i, 0)),
                pl.BlockSpec((self.n_fft, self.n_ri), lambda i: (0, 0)),
                pl.BlockSpec((self.n_ri, self.n_mel_pad), lambda i: (0, 0)),
                pl.BlockSpec((self.n_mel_pad, self.n_out_pad), lambda i: (0, 0)),
            ],
            out_specs=pl.BlockSpec((tm, self.n_out_pad), lambda i: (i, 0)),
            compiler_params=pltpu.CompilerParams(
                dimension_semantics=("parallel",),
                vmem_limit_bytes=32 * 1024 * 1024,   # above v5e's 16 MiB default scope
            ),
        )(frames2d, self.wcs, self.fb, self.dct)

        mfcc = out[:M, :self.n_mfcc]
        # (M, n_mfcc) -> (B, C, F, n_mfcc) -> (B, C, n_mfcc, F)   [matches torch output]
        return jnp.transpose(mfcc.reshape(B, C, n_frames, self.n_mfcc), (0, 1, 3, 2))

    # -- pure-JAX f32 reference (for in-script validation only) ---------------
    def reference(self, wav: jax.Array) -> jax.Array:
        B, C, T = wav.shape
        pad = (self.win_length - self.hop_length) // 2
        wav_p = jnp.pad(wav, ((0, 0), (0, 0), (pad, pad)), mode="reflect")
        T_p = T + 2 * pad
        n_frames = 1 + (T_p - self.n_fft) // self.hop_length
        idx = (jnp.arange(n_frames)[:, None] * self.hop_length
               + jnp.arange(self.n_fft)[None, :])
        frames = wav_p[:, :, idx].astype(jnp.float32)          # (B, C, F, n_fft)
        real = frames @ self._wc
        imag = frames @ self._ws
        power = real * real + imag * imag
        mel = power @ self._fb
        log_mel = (10.0 / float(np.log(10.0))) * jnp.log(jnp.maximum(mel, 1e-10))
        mfcc = log_mel @ self._dct                             # (B, C, F, n_mfcc)
        return jnp.transpose(mfcc, (0, 1, 3, 2))


if __name__ == "__main__":
    key = jax.random.PRNGKey(0)
    B, C, T = 2, 1, 1600                       # 0.1 s of 16 kHz audio per item
    wav = jax.random.normal(key, (B, C, T), dtype=jnp.float32) * 0.1

    mfcc_mod = MFCCsCalculatorPallas()
    mfccs = jax.block_until_ready(mfcc_mod(wav))

    # Expected: padded length 1952 -> 10 frames -> (2, 1, 25, 10)
    assert mfccs.shape == (B, C, 25, 10), mfccs.shape
    assert mfccs.dtype == jnp.float32
    assert bool(jnp.all(jnp.isfinite(mfccs)))

    # Validate against the f32 pure-JAX reference (bf16 DFT/mel/DCT inputs -> small error).
    ref = jax.block_until_ready(mfcc_mod.reference(wav))
    max_err = float(jnp.max(jnp.abs(mfccs - ref)))
    assert max_err < 1.0, max_err

    print("KERNEL_OK")
</pallas_src>

<mosaic_0001>
module attributes {stable_mosaic.version = 11 : i64} {
  func.func @_mfcc_kernel(%arg0: i32, %arg1: memref<16x512xbf16, #tpu.memory_space<vmem>>, %arg2: memref<512x640xbf16, #tpu.memory_space<vmem>>, %arg3: memref<640x128xbf16, #tpu.memory_space<vmem>>, %arg4: memref<128x128xbf16, #tpu.memory_space<vmem>>, %arg5: memref<16x128xf32, #tpu.memory_space<vmem>>) attributes {dimension_semantics = [#tpu.dimension_semantics<parallel>], iteration_bounds = array<i64: 2>, scalar_prefetch = 0 : i64, scratch_operands = 0 : i64, tpu.core_type = #tpu.core_type<tc>, window_params = [{transform_indices = @transform_0, window_bounds = array<i64: 16, 512>}, {pipeline_mode = #tpu.pipeline_mode<synchronous>, transform_indices = @transform_1, window_bounds = array<i64: 512, 640>}, {pipeline_mode = #tpu.pipeline_mode<synchronous>, transform_indices = @transform_2, window_bounds = array<i64: 640, 128>}, {pipeline_mode = #tpu.pipeline_mode<synchronous>, transform_indices = @transform_3, window_bounds = array<i64: 128, 128>}, {transform_indices = @transform_4, window_bounds = array<i64: 16, 128>}]} {
    %c0 = arith.constant 0 : index
    %c0_0 = arith.constant 0 : index
    %0 = vector.load %arg1[%c0, %c0_0] : memref<16x512xbf16, #tpu.memory_space<vmem>>, vector<16x512xbf16>
    %c0_1 = arith.constant 0 : index
    %c0_2 = arith.constant 0 : index
    %1 = vector.load %arg2[%c0_1, %c0_2] : memref<512x640xbf16, #tpu.memory_space<vmem>>, vector<512x640xbf16>
    %cst = arith.constant dense<0.000000e+00> : vector<16x640xf32>
    %2 = tpu.matmul %0, %1, %cst {dimension_numbers = #tpu.dot_dimension_numbers<[1], [0], [0], [1], [0, 0, 1, 1], [], []>} : vector<16x512xbf16>, vector<512x640xbf16>, vector<16x640xf32> -> vector<16x640xf32>
    %3 = arith.mulf %2, %2 : vector<16x640xf32>
    %4 = arith.truncf %3 : vector<16x640xf32> to vector<16x640xbf16>
    %c0_3 = arith.constant 0 : index
    %c0_4 = arith.constant 0 : index
    %5 = vector.load %arg3[%c0_3, %c0_4] : memref<640x128xbf16, #tpu.memory_space<vmem>>, vector<640x128xbf16>
    %cst_5 = arith.constant dense<0.000000e+00> : vector<16x128xf32>
    %6 = tpu.matmul %4, %5, %cst_5 {dimension_numbers = #tpu.dot_dimension_numbers<[1], [0], [0], [1], [0, 0, 1, 1], [], []>} : vector<16x640xbf16>, vector<640x128xbf16>, vector<16x128xf32> -> vector<16x128xf32>
    %cst_6 = arith.constant 1.000000e-10 : f32
    %7 = vector.broadcast %cst_6 : f32 to vector<16x128xf32>
    %8 = arith.maximumf %6, %7 : vector<16x128xf32>
    %9 = math.log %8 : vector<16x128xf32>
    %10 = arith.truncf %9 : vector<16x128xf32> to vector<16x128xbf16>
    %c0_7 = arith.constant 0 : index
    %c0_8 = arith.constant 0 : index
    %11 = vector.load %arg4[%c0_7, %c0_8] : memref<128x128xbf16, #tpu.memory_space<vmem>>, vector<128x128xbf16>
    %cst_9 = arith.constant dense<0.000000e+00> : vector<16x128xf32>
    %12 = tpu.matmul %10, %11, %cst_9 {dimension_numbers = #tpu.dot_dimension_numbers<[1], [0], [0], [1], [0, 0, 1, 1], [], []>} : vector<16x128xbf16>, vector<128x128xbf16>, vector<16x128xf32> -> vector<16x128xf32>
    %c0_10 = arith.constant 0 : index
    %c0_11 = arith.constant 0 : index
    %13 = vector.load %arg5[%c0_10, %c0_11] : memref<16x128xf32, #tpu.memory_space<vmem>>, vector<16x128xf32>
    tpu.vector_store %arg5[%c0_10, %c0_11], %12 {strides = array<i32>} : memref<16x128xf32, #tpu.memory_space<vmem>>, vector<16x128xf32>,
    return
  }
  func.func @transform_0(%arg0: i32) -> (i32, i32) {
    %c0_i32 = arith.constant 0 : i32
    %c0_i32_0 = arith.constant 0 : i32
    return %arg0, %c0_i32 : i32, i32
  }
  func.func @transform_1(%arg0: i32) -> (i32, i32) {
    %c0_i32 = arith.constant 0 : i32
    %c0_i32_0 = arith.constant 0 : i32
    %c0_i32_1 = arith.constant 0 : i32
    return %c0_i32, %c0_i32_0 : i32, i32
  }
  func.func @transform_2(%arg0: i32) -> (i32, i32) {
    %c0_i32 = arith.constant 0 : i32
    %c0_i32_0 = arith.constant 0 : i32
    %c0_i32_1 = arith.constant 0 : i32
    return %c0_i32, %c0_i32_0 : i32, i32
  }
  func.func @transform_3(%arg0: i32) -> (i32, i32) {
    %c0_i32 = arith.constant 0 : i32
    %c0_i32_0 = arith.constant 0 : i32
    %c0_i32_1 = arith.constant 0 : i32
    return %c0_i32, %c0_i32_0 : i32, i32
  }
  func.func @transform_4(%arg0: i32) -> (i32, i32) {
    %c0_i32 = arith.constant 0 : i32
    %c0_i32_0 = arith.constant 0 : i32
    return %arg0, %c0_i32 : i32, i32
  }
}

</mosaic_0001>

<llo_original>
// kernel: tpu_custom_call.1
$region0: #{tpu_custom_call.1}
  #allocation0 [shape = 'u32[]', space=smem, size = 0x4, offset = 0x4, fixed_abs, tag = 'smem constant byte address 0x4 - core index']
  #allocation1 [shape = 'u32[144,128]{1,0:T(1,128)}', space=vmem, size = 0x12000, scoped, tag = 'internal scratch']
  %s0 = inlined_call_operand.hbm [shape: bf16[32,512], index: 0, kind: input, shape index: {}]
  %s1 = inlined_call_operand.hbm [shape: bf16[512,640], index: 1, kind: input, shape index: {}]
  %s2 = inlined_call_operand.hbm [shape: bf16[640,128], index: 2, kind: input, shape index: {}]
  %s3 = inlined_call_operand.hbm [shape: bf16[128,128], index: 3, kind: input, shape index: {}]
  %s4 = inlined_call_operand.hbm [shape: f32[32,128], index: 4, kind: output, shape index: {}]
  %s5 = sld [smem:[#allocation0]]
  $region65: #{tpu_custom_call.1} parent=0
    _
  %s7 = ssub.s32 1, %s5
  %s8 = scalar_select 0, %s7, %s5
  $region1: #{tpu_custom_call.1} parent=0
    #allocation2 [shape = 'u8[32768]{0}', space=vmem, size = 0x8000, scoped, tag = 'input window, operand 0']
    #allocation3 [shape = 's32[2]{0}', space=sflag, size = 0x8, scoped, tag = 'scoped memory for tpu_custom_call.1']
    #allocation4 [shape = 's32[2]{0}', space=sflag, size = 0x8, scoped, tag = 'scoped memory for tpu_custom_call.1']
    #allocation5 [shape = 'u8[655360]{0}', space=vmem, size = 0xa0000, scoped, tag = 'input window, operand 1, single buffered']
    #allocation6 [shape = 's32[1]{0}', space=sflag, size = 0x4, scoped, tag = 'scoped memory for tpu_custom_call.1']
    #allocation7 [shape = 'u8[163840]{0}', space=vmem, size = 0x28000, scoped, tag = 'input window, operand 2, single buffered']
    #allocation8 [shape = 'u8[32768]{0}', space=vmem, size = 0x8000, scoped, tag = 'input window, operand 3, single buffered']
    #allocation9 [shape = 's32[1]{0}', space=sflag, size = 0x4, scoped, tag = 'scoped memory for tpu_custom_call.1']
    #allocation10 [shape = 'u8[16384]{0}', space=vmem, size = 0x4000, scoped, tag = 'output window, operand 0']
    %9 = vsyncpa [#allocation3], 0
    %s10 = scalar_lea.sflag [#allocation3], 1
    %11 = vsyncpa %s10, 0
    %12 = vsyncpa [#allocation6], 0
    %13 = vsyncpa [#allocation9], 0
    %14 = vsyncpa [#allocation4], 0
    %s15 = scalar_lea.sflag [#allocation4], 1
    %16 = vsyncpa %s15, 0
    loop: start=0, step=1, limit=4
    $region2: #{tpu_custom_call.1} parent=1 // loop_pre_header
      _
    $region3: #{tpu_custom_call.1} parent=1 // loop_header
      %s18 = sphi 0, %s22
      %p19 = scmp.ge.s32.totalorder %s18, 4
      %s28 = sphi 0, %s30
      %s31 = sphi 0, %s28
      %s32 = sphi 0, %s31
      %s48 = sphi 0, %s32
      %s52 = sphi 0, %s52
      %s54 = sphi 0, %s52
      %s55 = sphi 0, %s54
      %s69 = sphi 0, %s55
      %s73 = sphi 0, %s73
      %s75 = sphi 0, %s73
      %s76 = sphi 0, %s75
      %s90 = sphi 0, %s76
      %s94 = sphi 0, %s94
      %s96 = sphi 0, %s94
      %s97 = sphi 0, %s96
      %s111 = sphi 0, %s97
      %s117 = sphi 0, %s119
      %s120 = sphi 0, %s117
      %s121 = sphi 0, %s120
      %s137 = sphi 0, %s121
    $region4: #{tpu_custom_call.1} parent=1 // loop_header_branch
      %21 = sbr.rel (%p19) target = $region8
    $region5: #{tpu_custom_call.1} parent=1 // loop_body
      %s23 = ssub.s32 %s18, 1
      %s24 = ssub.s32 %s18, 2
      %s25 = sadd.s32 %s18, 1
      %s26 = ssub.s32 %s18, %s25
      %p27 = scmp.eq.s32.totalorder %s26, 0
      %s29 = sadd.s32 %s28, 1
      %s30 = scalar_select %p27, %s28, %s29
      %p33 = pneg %p27
      %p34 = scmp.eq.s32.totalorder %s18, 1
      %p35 = por %p33, %p34
      %p36 = scmp.ne.s32.totalorder %s28, %s31
      %p37 = scmp.eq.s32.totalorder %s18, 0
      %p38 = por %p36, %p37
      %p39 = scmp.ne.s32.totalorder %s28, %s31
      %p40 = scmp.eq.s32.totalorder %s23, 1
      %p41 = por %p39, %p40
      %p42 = scmp.ne.s32.totalorder %s31, %s32
      %p43 = scmp.eq.s32.totalorder %s23, 0
      %p44 = por %p42, %p43
      %p45 = scmp.ne.s32.totalorder %s31, %s32
      %p46 = scmp.eq.s32.totalorder %s24, 1
      %p47 = por %p45, %p46
      %p49 = scmp.ne.s32.totalorder %s32, %s48
      %p50 = scmp.eq.s32.totalorder %s24, 0
      %p51 = por %p49, %p50
      %s53 = sadd.s32 %s52, 1
      %p56 = scmp.eq.s32.totalorder %s18, 1
      %p57 = scmp.ne.s32.totalorder %s52, %s54
      %p58 = scmp.eq.s32.totalorder %s18, 0
      %p59 = por %p57, %p58
      %p60 = scmp.ne.s32.totalorder %s52, %s54
      %p61 = scmp.eq.s32.totalorder %s23, 1
      %p62 = por %p60, %p61
      %p63 = scmp.ne.s32.totalorder %s54, %s55
      %p64 = scmp.eq.s32.totalorder %s23, 0
      %p65 = por %p63, %p64
      %p66 = scmp.ne.s32.totalorder %s54, %s55
      %p67 = scmp.eq.s32.totalorder %s24, 1
      %p68 = por %p66, %p67
      %p70 = scmp.ne.s32.totalorder %s55, %s69
      %p71 = scmp.eq.s32.totalorder %s24, 0
      %p72 = por %p70, %p71
      %s74 = sadd.s32 %s73, 1
      %p77 = scmp.eq.s32.totalorder %s18, 1
      %p78 = scmp.ne.s32.totalorder %s73, %s75
      %p79 = scmp.eq.s32.totalorder %s18, 0
      %p80 = por %p78, %p79
      %p81 = scmp.ne.s32.totalorder %s73, %s75
      %p82 = scmp.eq.s32.totalorder %s23, 1
      %p83 = por %p81, %p82
      %p84 = scmp.ne.s32.totalorder %s75, %s76
      %p85 = scmp.eq.s32.totalorder %s23, 0
      %p86 = por %p84, %p85
      %p87 = scmp.ne.s32.totalorder %s75, %s76
      %p88 = scmp.eq.s32.totalorder %s24, 1
      %p89 = por %p87, %p88
      %p91 = scmp.ne.s32.totalorder %s76, %s90
      %p92 = scmp.eq.s32.totalorder %s24, 0
      %p93 = por %p91, %p92
      %s95 = sadd.s32 %s94, 1
      %p98 = scmp.eq.s32.totalorder %s18, 1
      %p99 = scmp.ne.s32.totalorder %s94, %s96
      %p100 = scmp.eq.s32.totalorder %s18, 0
      %p101 = por %p99, %p100
      %p102 = scmp.ne.s32.totalorder %s94, %s96
      %p103 = scmp.eq.s32.totalorder %s23, 1
      %p104 = por %p102, %p103
      %p105 = scmp.ne.s32.totalorder %s96, %s97
      %p106 = scmp.eq.s32.totalorder %s23, 0
      %p107 = por %p105, %p106
      %p108 = scmp.ne.s32.totalorder %s96, %s97
      %p109 = scmp.eq.s32.totalorder %s24, 1
      %p110 = por %p108, %p109
      %p112 = scmp.ne.s32.totalorder %s97, %s111
      %p113 = scmp.eq.s32.totalorder %s24, 0
      %p114 = por %p112, %p113
      %s115 = ssub.s32 %s18, %s25
      %p116 = scmp.eq.s32.totalorder %s115, 0
      %s118 = sadd.s32 %s117, 1
      %s119 = scalar_select %p116, %s117, %s118
      %p122 = pneg %p116
      %p123 = scmp.eq.s32.totalorder %s18, 1
      %p124 = por %p122, %p123
      %p125 = scmp.ne.s32.totalorder %s117, %s120
      %p126 = scmp.eq.s32.totalorder %s18, 0
      %p127 = por %p125, %p126
      %p128 = scmp.ne.s32.totalorder %s117, %s120
      %p129 = scmp.eq.s32.totalorder %s23, 1
      %p130 = por %p128, %p129
      %p131 = scmp.ne.s32.totalorder %s120, %s121
      %p132 = scmp.eq.s32.totalorder %s23, 0
      %p133 = por %p131, %p132
      %p134 = scmp.ne.s32.totalorder %s120, %s121
      %p135 = scmp.eq.s32.totalorder %s24, 1
      %p136 = por %p134, %p135
      %p138 = scmp.ne.s32.totalorder %s121, %s137
      %p139 = scmp.eq.s32.totalorder %s24, 0
      %p140 = por %p138, %p139
      %p141 = scmp.le.s32.totalorder 1, %s18
      %p142 = scmp.lt.s32.totalorder %s18, 3
      %p143 = pnand %p141, %p142
      %p144 = pneg %p143
      // Predicated region
      $region9: #{tpu_custom_call.1} parent=5 // pred_check
        _
      $region10: #{tpu_custom_call.1} parent=5 // pred_check_branch
        %146 = sbr.rel (%p143) target = $region12
      $region11: #{tpu_custom_call.1} parent=5 // pred_region
        %s147 = ssub.s32 %s18, 1
        // Predicated region
        $region13: #{tpu_custom_call.1} parent=11 // pred_check
          %p148 = pneg %p65
        $region14: #{tpu_custom_call.1} parent=11 // pred_check_branch
          %150 = sbr.rel (%p148) target = $region16
        $region15: #{tpu_custom_call.1} parent=11 // pred_region
          %s152 = ssub.s32 20480, 20480
          %153 = vsyncadd [#allocation6], %s152
          %s154 = sshll.u32 [#allocation5], 4
          %s155 = int_to_ptr.vmem [resolvable:$true] %s154
          %160 = dma.hbm_to_vmem [thread:$0]  %s1, 20480, %s155, [#allocation6], 320, 320, 20
        $region16: #{tpu_custom_call.1} parent=11 // pred_fallthru
          _
        // Predicated region
        $region17: #{tpu_custom_call.1} parent=11 // pred_check
          %p161 = pneg %p86
        $region18: #{tpu_custom_call.1} parent=11 // pred_check_branch
          %163 = sbr.rel (%p161) target = $region20
        $region19: #{tpu_custom_call.1} parent=11 // pred_region
          %s165 = ssub.s32 5120, 5120
          %166 = vsyncadd [#allocation6], %s165
          %s167 = sshll.u32 [#allocation7], 4
          %s168 = int_to_ptr.vmem [resolvable:$true] %s167
          %173 = dma.hbm_to_vmem [thread:$0]  %s2, 5120, %s168, [#allocation6], 64, 64, 4
        $region20: #{tpu_custom_call.1} parent=11 // pred_fallthru
          _
        // Predicated region
        $region21: #{tpu_custom_call.1} parent=11 // pred_check
          %p174 = pneg %p107
        $region22: #{tpu_custom_call.1} parent=11 // pred_check_branch
          %176 = sbr.rel (%p174) target = $region24
        $region23: #{tpu_custom_call.1} parent=11 // pred_region
          %s178 = ssub.s32 1024, 1024
          %179 = vsyncadd [#allocation9], %s178
          %s180 = sshll.u32 [#allocation8], 4
          %s181 = int_to_ptr.vmem [resolvable:$true] %s180
          %186 = dma.hbm_to_vmem [thread:$0]  %s3, 1024, %s181, [#allocation9], 64, 64, 4
        $region24: #{tpu_custom_call.1} parent=11 // pred_fallthru
          _
      $region12: #{tpu_custom_call.1} parent=5 // pred_fallthru
        _
      %p187 = scmp.lt.s32.totalorder %s18, 2
      // Predicated region
      $region25: #{tpu_custom_call.1} parent=5 // pred_check
        %p188 = pneg %p187
      $region26: #{tpu_custom_call.1} parent=5 // pred_check_branch
        %190 = sbr.rel (%p188) target = $region28
      $region27: #{tpu_custom_call.1} parent=5 // pred_region
        // Predicated region
        $region29: #{tpu_custom_call.1} parent=27 // pred_check
          %p191 = pneg %p38
        $region30: #{tpu_custom_call.1} parent=27 // pred_check_branch
          %193 = sbr.rel (%p191) target = $region32
        $region31: #{tpu_custom_call.1} parent=27 // pred_region
          %s194 = sand.u32 %s28, 1
          %s195 = scalar_lea.sflag [#allocation3], %s194
          %s196 = sand.u32 %s28, 1
          %s197 = smul.addr %s196, 32
          %s198 = scalar_lea.vmem [#allocation2], %s197
          %s199 = smul.u32 2, %s18
          %s201 = ssub.s32 512, 512
          %202 = vsyncadd %s195, %s201
          %s203 = smul.addr %s199, 4
          %s204 = smul.addr %s203, 64
          %s205 = scalar_lea.hbm %s0, %s204
          %s206 = sshll.u32 %s198, 4
          %s207 = int_to_ptr.vmem [resolvable:$true] %s206
          %212 = dma.hbm_to_vmem [thread:$0]  %s205, 512, %s207, %s195, 256, 256, 16
        $region32: #{tpu_custom_call.1} parent=27 // pred_fallthru
          _
      $region28: #{tpu_custom_call.1} parent=5 // pred_fallthru
        _
      %p213 = scmp.le.s32.totalorder 1, %s18
      %p214 = scmp.lt.s32.totalorder %s18, 3
      %p215 = pnand %p213, %p214
      %p216 = pneg %p215
      // Predicated region
      $region33: #{tpu_custom_call.1} parent=5 // pred_check
        _
      $region34: #{tpu_custom_call.1} parent=5 // pred_check_branch
        %218 = sbr.rel (%p215) target = $region36
      $region35: #{tpu_custom_call.1} parent=5 // pred_region
        %s219 = ssub.s32 %s18, 1
        %s220 = sand.u32 %s31, 1
        %s221 = scalar_lea.sflag [#allocation3], %s220
        %s222 = sand.u32 %s31, 1
        %s223 = smul.addr %s222, 32
        %s224 = scalar_lea.vmem [#allocation2], %s223
        // Predicated region
        $region37: #{tpu_custom_call.1} parent=35 // pred_check
          %p225 = pneg %p44
        $region38: #{tpu_custom_call.1} parent=35 // pred_check_branch
          %227 = sbr.rel (%p225) target = $region40
        $region39: #{tpu_custom_call.1} parent=35 // pred_region
          %228 = dma.done %s221, 512
        $region40: #{tpu_custom_call.1} parent=35 // pred_fallthru
          _
        // Predicated region
        $region41: #{tpu_custom_call.1} parent=35 // pred_check
          %p229 = pneg %p65
        $region42: #{tpu_custom_call.1} parent=35 // pred_check_branch
          %231 = sbr.rel (%p229) target = $region44
        $region43: #{tpu_custom_call.1} parent=35 // pred_region
          %232 = dma.done [#allocation6], 20480
        $region44: #{tpu_custom_call.1} parent=35 // pred_fallthru
          _
        // Predicated region
        $region45: #{tpu_custom_call.1} parent=35 // pred_check
          %p233 = pneg %p86
        $region46: #{tpu_custom_call.1} parent=35 // pred_check_branch
          %235 = sbr.rel (%p233) target = $region48
        $region47: #{tpu_custom_call.1} parent=35 // pred_region
          %236 = dma.done [#allocation6], 5120
        $region48: #{tpu_custom_call.1} parent=35 // pred_fallthru
          _
        // Predicated region
        $region49: #{tpu_custom_call.1} parent=35 // pred_check
          %p237 = pneg %p107
        $region50: #{tpu_custom_call.1} parent=35 // pred_check_branch
          %239 = sbr.rel (%p237) target = $region52
        $region51: #{tpu_custom_call.1} parent=35 // pred_region
          %240 = dma.done [#allocation9], 1024
        $region52: #{tpu_custom_call.1} parent=35 // pred_fallthru
          _
        %s241 = sand.u32 %s31, 1
        %s242 = scalar_lea.sflag [#allocation3], %s241
        %s243 = sand.u32 %s31, 1
        %s244 = smul.addr %s243, 32
        %s245 = scalar_lea.vmem [#allocation2], %s244
        %p246 = pneg %p44
        %p247 = pneg %p41
        %p248 = pneg %p65
        %p249 = pneg %p62
        %p250 = pneg %p86
        %p251 = pneg %p83
        %p252 = pneg %p107
        %p253 = pneg %p104
        %p254 = pneg %p133
        %p255 = pneg %p130
        %s256 = sand.u32 %s120, 1
        %s257 = scalar_lea.sflag [#allocation4], %s256
        %s258 = sand.u32 %s120, 1
        %s259 = smul.addr %s258, 16
        %s260 = scalar_lea.vmem [#allocation10], %s259
        %s261 = smul.u32 2, %s23
        %s262 = smul.u32 2, %s23
        %v264 = vld [vmem:[%s224] sm:$0xff]
        %v265 = vld [vmem:[%s224 + $0x8] sm:$0xff]
        %v266 = vld [vmem:[%s224 + $0x10] sm:$0xff]
        %v267 = vld [vmem:[%s224 + $0x18] sm:$0xff]
        %v268 = vld [vmem:[#allocation5] sm:$0xff]
        %v269 = vld [vmem:[#allocation5 + $0x8] sm:$0xff]
        %v270 = vld [vmem:[#allocation5 + $0x10] sm:$0xf]
        %v271 = vld [vmem:[#allocation5 + $0x14] sm:$0xff]
        %v272 = vld [vmem:[#allocation5 + $0x1c] sm:$0xff]
        %v273 = vld [vmem:[#allocation5 + $0x24] sm:$0xf]
        %v274 = vld [vmem:[#allocation5 + $0x28] sm:$0xff]
        %v275 = vld [vmem:[#allocation5 + $0x30] sm:$0xff]
        %v276 = vld [vmem:[#allocation5 + $0x38] sm:$0xf]
        %v277 = vld [vmem:[#allocation5 + $0x3c] sm:$0xff]
        %v278 = vld [vmem:[#allocation5 + $0x44] sm:$0xff]
        %v279 = vld [vmem:[#allocation5 + $0x4c] sm:$0xf]
        %v280 = vld [vmem:[#allocation5 + $0x50] sm:$0xff]
        %v281 = vld [vmem:[#allocation5 + $0x58] sm:$0xff]
        %v282 = vld [vmem:[#allocation5 + $0x60] sm:$0xf]
        %v283 = vld [vmem:[#allocation5 + $0x64] sm:$0xff]
        %v284 = vld [vmem:[#allocation5 + $0x6c] sm:$0xff]
        %v285 = vld [vmem:[#allocation5 + $0x74] sm:$0xf]
        %v286 = vld [vmem:[#allocation5 + $0x78] sm:$0xff]
        %v287 = vld [vmem:[#allocation5 + $0x80] sm:$0xff]
        %v288 = vld [vmem:[#allocation5 + $0x88] sm:$0xf]
        %v289 = vld [vmem:[#allocation5 + $0x8c] sm:$0xff]
        %v290 = vld [vmem:[#allocation5 + $0x94] sm:$0xff]
        %v291 = vld [vmem:[#allocation5 + $0x9c] sm:$0xf]
        %v292 = vld [vmem:[#allocation5 + $0xa0] sm:$0xff]
        %v293 = vld [vmem:[#allocation5 + $0xa8] sm:$0xff]
        %v294 = vld [vmem:[#allocation5 + $0xb0] sm:$0xf]
        %v295 = vld [vmem:[#allocation5 + $0xb4] sm:$0xff]
        %v296 = vld [vmem:[#allocation5 + $0xbc] sm:$0xff]
        %v297 = vld [vmem:[#allocation5 + $0xc4] sm:$0xf]
        %v298 = vld [vmem:[#allocation5 + $0xc8] sm:$0xff]
        %v299 = vld [vmem:[#allocation5 + $0xd0] sm:$0xff]
        %v300 = vld [vmem:[#allocation5 + $0xd8] sm:$0xf]
        %v301 = vld [vmem:[#allocation5 + $0xdc] sm:$0xff]
        %v302 = vld [vmem:[#allocation5 + $0xe4] sm:$0xff]
        %v303 = vld [vmem:[#allocation5 + $0xec] sm:$0xf]
        %v304 = vld [vmem:[#allocation5 + $0xf0] sm:$0xff]
        %v305 = vld [vmem:[#allocation5 + $0xf8] sm:$0xff]
        %v306 = vld [vmem:[#allocation5 + $0x100] sm:$0xf]
        %v307 = vld [vmem:[#allocation5 + $0x104] sm:$0xff]
        %v308 = vld [vmem:[#allocation5 + $0x10c] sm:$0xff]
        %v309 = vld [vmem:[#allocation5 + $0x114] sm:$0xf]
        %v310 = vld [vmem:[#allocation5 + $0x118] sm:$0xff]
        %v311 = vld [vmem:[#allocation5 + $0x120] sm:$0xff]
        %v312 = vld [vmem:[#allocation5 + $0x128] sm:$0xf]
        %v313 = vld [vmem:[#allocation5 + $0x12c] sm:$0xff]
        %v314 = vld [vmem:[#allocation5 + $0x134] sm:$0xff]
        %v315 = vld [vmem:[#allocation5 + $0x13c] sm:$0xf]
        %v316 = vld [vmem:[#allocation5 + $0x140] sm:$0xff]
        %v317 = vld [vmem:[#allocation5 + $0x148] sm:$0xff]
        %v318 = vld [vmem:[#allocation5 + $0x150] sm:$0xf]
        %v319 = vld [vmem:[#allocation5 + $0x154] sm:$0xff]
        %v320 = vld [vmem:[#allocation5 + $0x15c] sm:$0xff]
        %v321 = vld [vmem:[#allocation5 + $0x164] sm:$0xf]
        %v322 = vld [vmem:[#allocation5 + $0x168] sm:$0xff]
        %v323 = vld [vmem:[#allocation5 + $0x170] sm:$0xff]
        %v324 = vld [vmem:[#allocation5 + $0x178] sm:$0xf]
        %v325 = vld [vmem:[#allocation5 + $0x17c] sm:$0xff]
        %v326 = vld [vmem:[#allocation5 + $0x184] sm:$0xff]
        %v327 = vld [vmem:[#allocation5 + $0x18c] sm:$0xf]
        %v328 = vld [vmem:[#allocation5 + $0x190] sm:$0xff]
        %v329 = vld [vmem:[#allocation5 + $0x198] sm:$0xff]
        %v330 = vld [vmem:[#allocation5 + $0x1a0] sm:$0xf]
        %v331 = vld [vmem:[#allocation5 + $0x1a4] sm:$0xff]
        %v332 = vld [vmem:[#allocation5 + $0x1ac] sm:$0xff]
        %v333 = vld [vmem:[#allocation5 + $0x1b4] sm:$0xf]
        %v334 = vld [vmem:[#allocation5 + $0x1b8] sm:$0xff]
        %v335 = vld [vmem:[#allocation5 + $0x1c0] sm:$0xff]
        %v336 = vld [vmem:[#allocation5 + $0x1c8] sm:$0xf]
        %v337 = vld [vmem:[#allocation5 + $0x1cc] sm:$0xff]
        %v338 = vld [vmem:[#allocation5 + $0x1d4] sm:$0xff]
        %v339 = vld [vmem:[#allocation5 + $0x1dc] sm:$0xf]
        %v340 = vld [vmem:[#allocation5 + $0x1e0] sm:$0xff]
        %v341 = vld [vmem:[#allocation5 + $0x1e8] sm:$0xff]
        %v342 = vld [vmem:[#allocation5 + $0x1f0] sm:$0xf]
        %v343 = vld [vmem:[#allocation5 + $0x1f4] sm:$0xff]
        %v344 = vld [vmem:[#allocation5 + $0x1fc] sm:$0xff]
        %v345 = vld [vmem:[#allocation5 + $0x204] sm:$0xf]
        %v346 = vld [vmem:[#allocation5 + $0x208] sm:$0xff]
        %v347 = vld [vmem:[#allocation5 + $0x210] sm:$0xff]
        %v348 = vld [vmem:[#allocation5 + $0x218] sm:$0xf]
        %v349 = vld [vmem:[#allocation5 + $0x21c] sm:$0xff]
        %v350 = vld [vmem:[#allocation5 + $0x224] sm:$0xff]
        %v351 = vld [vmem:[#allocation5 + $0x22c] sm:$0xf]
        %v352 = vld [vmem:[#allocation5 + $0x230] sm:$0xff]
        %v353 = vld [vmem:[#allocation5 + $0x238] sm:$0xff]
        %v354 = vld [vmem:[#allocation5 + $0x240] sm:$0xf]
        %v355 = vld [vmem:[#allocation5 + $0x244] sm:$0xff]
        %v356 = vld [vmem:[#allocation5 + $0x24c] sm:$0xff]
        %v357 = vld [vmem:[#allocation5 + $0x254] sm:$0xf]
        %v358 = vld [vmem:[#allocation5 + $0x258] sm:$0xff]
        %v359 = vld [vmem:[#allocation5 + $0x260] sm:$0xff]
        %v360 = vld [vmem:[#allocation5 + $0x268] sm:$0xf]
        %v361 = vld [vmem:[#allocation5 + $0x26c] sm:$0xff]
        %v362 = vld [vmem:[#allocation5 + $0x274] sm:$0xff]
        %v363 = vld [vmem:[#allocation5 + $0x27c] sm:$0xf]
        %v364 = vld [vmem:[#allocation5 + $0x280] sm:$0xff]
        %v365 = vld [vmem:[#allocation5 + $0x288] sm:$0xff]
        %v366 = vld [vmem:[#allocation5 + $0x290] sm:$0xf]
        %v367 = vld [vmem:[#allocation5 + $0x294] sm:$0xff]
        %v368 = vld [vmem:[#allocation5 + $0x29c] sm:$0xff]
        %v369 = vld [vmem:[#allocation5 + $0x2a4] sm:$0xf]
        %v370 = vld [vmem:[#allocation5 + $0x2a8] sm:$0xff]
        %v371 = vld [vmem:[#allocation5 + $0x2b0] sm:$0xff]
        %v372 = vld [vmem:[#allocation5 + $0x2b8] sm:$0xf]
        %v373 = vld [vmem:[#allocation5 + $0x2bc] sm:$0xff]
        %v374 = vld [vmem:[#allocation5 + $0x2c4] sm:$0xff]
        %v375 = vld [vmem:[#allocation5 + $0x2cc] sm:$0xf]
        %v376 = vld [vmem:[#allocation5 + $0x2d0] sm:$0xff]
        %v377 = vld [vmem:[#allocation5 + $0x2d8] sm:$0xff]
        %v378 = vld [vmem:[#allocation5 + $0x2e0] sm:$0xf]
        %v379 = vld [vmem:[#allocation5 + $0x2e4] sm:$0xff]
        %v380 = vld [vmem:[#allocation5 + $0x2ec] sm:$0xff]
        %v381 = vld [vmem:[#allocation5 + $0x2f4] sm:$0xf]
        %v382 = vld [vmem:[#allocation5 + $0x2f8] sm:$0xff]
        %v383 = vld [vmem:[#allocation5 + $0x300] sm:$0xff]
        %v384 = vld [vmem:[#allocation5 + $0x308] sm:$0xf]
        %v385 = vld [vmem:[#allocation5 + $0x30c] sm:$0xff]
        %v386 = vld [vmem:[#allocation5 + $0x314] sm:$0xff]
        %v387 = vld [vmem:[#allocation5 + $0x31c] sm:$0xf]
        %v388 = vld [vmem:[#allocation5 + $0x320] sm:$0xff]
        %v389 = vld [vmem:[#allocation5 + $0x328] sm:$0xff]
        %v390 = vld [vmem:[#allocation5 + $0x330] sm:$0xf]
        %v391 = vld [vmem:[#allocation5 + $0x334] sm:$0xff]
        %v392 = vld [vmem:[#allocation5 + $0x33c] sm:$0xff]
        %v393 = vld [vmem:[#allocation5 + $0x344] sm:$0xf]
        %v394 = vld [vmem:[#allocation5 + $0x348] sm:$0xff]
        %v395 = vld [vmem:[#allocation5 + $0x350] sm:$0xff]
        %v396 = vld [vmem:[#allocation5 + $0x358] sm:$0xf]
        %v397 = vld [vmem:[#allocation5 + $0x35c] sm:$0xff]
        %v398 = vld [vmem:[#allocation5 + $0x364] sm:$0xff]
        %v399 = vld [vmem:[#allocation5 + $0x36c] sm:$0xf]
        %v400 = vld [vmem:[#allocation5 + $0x370] sm:$0xff]
        %v401 = vld [vmem:[#allocation5 + $0x378] sm:$0xff]
        %v402 = vld [vmem:[#allocation5 + $0x380] sm:$0xf]
        %v403 = vld [vmem:[#allocation5 + $0x384] sm:$0xff]
        %v404 = vld [vmem:[#allocation5 + $0x38c] sm:$0xff]
        %v405 = vld [vmem:[#allocation5 + $0x394] sm:$0xf]
        %v406 = vld [vmem:[#allocation5 + $0x398] sm:$0xff]
        %v407 = vld [vmem:[#allocation5 + $0x3a0] sm:$0xff]
        %v408 = vld [vmem:[#allocation5 + $0x3a8] sm:$0xf]
        %v409 = vld [vmem:[#allocation5 + $0x3ac] sm:$0xff]
        %v410 = vld [vmem:[#allocation5 + $0x3b4] sm:$0xff]
        %v411 = vld [vmem:[#allocation5 + $0x3bc] sm:$0xf]
        %v412 = vld [vmem:[#allocation5 + $0x3c0] sm:$0xff]
        %v413 = vld [vmem:[#allocation5 + $0x3c8] sm:$0xff]
        %v414 = vld [vmem:[#allocation5 + $0x3d0] sm:$0xf]
        %v415 = vld [vmem:[#allocation5 + $0x3d4] sm:$0xff]
        %v416 = vld [vmem:[#allocation5 + $0x3dc] sm:$0xff]
        %v417 = vld [vmem:[#allocation5 + $0x3e4] sm:$0xf]
        %v418 = vld [vmem:[#allocation5 + $0x3e8] sm:$0xff]
        %v419 = vld [vmem:[#allocation5 + $0x3f0] sm:$0xff]
        %v420 = vld [vmem:[#allocation5 + $0x3f8] sm:$0xf]
        %v421 = vld [vmem:[#allocation5 + $0x3fc] sm:$0xff]
        %v422 = vld [vmem:[#allocation5 + $0x404] sm:$0xff]
        %v423 = vld [vmem:[#allocation5 + $0x40c] sm:$0xf]
        %v424 = vld [vmem:[#allocation5 + $0x410] sm:$0xff]
        %v425 = vld [vmem:[#allocation5 + $0x418] sm:$0xff]
        %v426 = vld [vmem:[#allocation5 + $0x420] sm:$0xf]
        %v427 = vld [vmem:[#allocation5 + $0x424] sm:$0xff]
        %v428 = vld [vmem:[#allocation5 + $0x42c] sm:$0xff]
        %v429 = vld [vmem:[#allocation5 + $0x434] sm:$0xf]
        %v430 = vld [vmem:[#allocation5 + $0x438] sm:$0xff]
        %v431 = vld [vmem:[#allocation5 + $0x440] sm:$0xff]
        %v432 = vld [vmem:[#allocation5 + $0x448] sm:$0xf]
        %v433 = vld [vmem:[#allocation5 + $0x44c] sm:$0xff]
        %v434 = vld [vmem:[#allocation5 + $0x454] sm:$0xff]
        %v435 = vld [vmem:[#allocation5 + $0x45c] sm:$0xf]
        %v436 = vld [vmem:[#allocation5 + $0x460] sm:$0xff]
        %v437 = vld [vmem:[#allocation5 + $0x468] sm:$0xff]
        %v438 = vld [vmem:[#allocation5 + $0x470] sm:$0xf]
        %v439 = vld [vmem:[#allocation5 + $0x474] sm:$0xff]
        %v440 = vld [vmem:[#allocation5 + $0x47c] sm:$0xff]
        %v441 = vld [vmem:[#allocation5 + $0x484] sm:$0xf]
        %v442 = vld [vmem:[#allocation5 + $0x488] sm:$0xff]
        %v443 = vld [vmem:[#allocation5 + $0x490] sm:$0xff]
        %v444 = vld [vmem:[#allocation5 + $0x498] sm:$0xf]
        %v445 = vld [vmem:[#allocation5 + $0x49c] sm:$0xff]
        %v446 = vld [vmem:[#allocation5 + $0x4a4] sm:$0xff]
        %v447 = vld [vmem:[#allocation5 + $0x4ac] sm:$0xf]
        %v448 = vld [vmem:[#allocation5 + $0x4b0] sm:$0xff]
        %v449 = vld [vmem:[#allocation5 + $0x4b8] sm:$0xff]
        %v450 = vld [vmem:[#allocation5 + $0x4c0] sm:$0xf]
        %v451 = vld [vmem:[#allocation5 + $0x4c4] sm:$0xff]
        %v452 = vld [vmem:[#allocation5 + $0x4cc] sm:$0xff]
        %v453 = vld [vmem:[#allocation5 + $0x4d4] sm:$0xf]
        %v454 = vld [vmem:[#allocation5 + $0x4d8] sm:$0xff]
        %v455 = vld [vmem:[#allocation5 + $0x4e0] sm:$0xff]
        %v456 = vld [vmem:[#allocation5 + $0x4e8] sm:$0xf]
        %v457 = vld [vmem:[#allocation5 + $0x4ec] sm:$0xff]
        %v458 = vld [vmem:[#allocation5 + $0x4f4] sm:$0xff]
        %v459 = vld [vmem:[#allocation5 + $0x4fc] sm:$0xf]
        %v464 = vunpack.c.l.b16 %v264
        %v465 = vunpack.c.h.b16 %v264
        %v466 = vunpack.c.l.b16 %v265
        %v467 = vunpack.c.h.b16 %v265
        %v468 = vunpack.c.l.b16 %v266
        %v469 = vunpack.c.h.b16 %v266
        %v470 = vunpack.c.l.b16 %v267
        %v471 = vunpack.c.h.b16 %v267
        %v472 = vpack.c.b16 %v468, %v464
        %v473 = vpack.c.b16 %v469, %v465
        %v474 = vpack.c.b16 %v470, %v466
        %v475 = vpack.c.b16 %v471, %v467
        %v672 = vunpack.c.l.b16 %v268
        %v673 = vunpack.c.h.b16 %v268
        %v674 = vunpack.c.l.b16 %v269
        %v675 = vunpack.c.h.b16 %v269
        %v676 = vunpack.c.l.b16 %v270
        %v677 = vunpack.c.l.b16 %v271
        %v678 = vunpack.c.h.b16 %v271
        %v679 = vunpack.c.l.b16 %v272
        %v680 = vunpack.c.h.b16 %v272
        %v681 = vunpack.c.l.b16 %v273
        %v682 = vunpack.c.l.b16 %v274
        %v683 = vunpack.c.h.b16 %v274
        %v684 = vunpack.c.l.b16 %v275
        %v685 = vunpack.c.h.b16 %v275
        %v686 = vunpack.c.l.b16 %v276
        %v687 = vunpack.c.l.b16 %v277
        %v688 = vunpack.c.h.b16 %v277
        %v689 = vunpack.c.l.b16 %v278
        %v690 = vunpack.c.h.b16 %v278
        %v691 = vunpack.c.l.b16 %v279
        %v692 = vunpack.c.l.b16 %v280
        %v693 = vunpack.c.h.b16 %v280
        %v694 = vunpack.c.l.b16 %v281
        %v695 = vunpack.c.h.b16 %v281
        %v696 = vunpack.c.l.b16 %v282
        %v697 = vunpack.c.l.b16 %v283
        %v698 = vunpack.c.h.b16 %v283
        %v699 = vunpack.c.l.b16 %v284
        %v700 = vunpack.c.h.b16 %v284
        %v701 = vunpack.c.l.b16 %v285
        %v702 = vunpack.c.l.b16 %v286
        %v703 = vunpack.c.h.b16 %v286
        %v704 = vunpack.c.l.b16 %v287
        %v705 = vunpack.c.h.b16 %v287
        %v706 = vunpack.c.l.b16 %v288
        %v707 = vunpack.c.l.b16 %v289
        %v708 = vunpack.c.h.b16 %v289
        %v709 = vunpack.c.l.b16 %v290
        %v710 = vunpack.c.h.b16 %v290
        %v711 = vunpack.c.l.b16 %v291
        %v712 = vunpack.c.l.b16 %v292
        %v713 = vunpack.c.h.b16 %v292
        %v714 = vunpack.c.l.b16 %v293
        %v715 = vunpack.c.h.b16 %v293
        %v716 = vunpack.c.l.b16 %v294
        %v717 = vunpack.c.l.b16 %v295
        %v718 = vunpack.c.h.b16 %v295
        %v719 = vunpack.c.l.b16 %v296
        %v720 = vunpack.c.h.b16 %v296
        %v721 = vunpack.c.l.b16 %v297
        %v722 = vunpack.c.l.b16 %v298
        %v723 = vunpack.c.h.b16 %v298
        %v724 = vunpack.c.l.b16 %v299
        %v725 = vunpack.c.h.b16 %v299
        %v726 = vunpack.c.l.b16 %v300
        %v727 = vunpack.c.l.b16 %v301
        %v728 = vunpack.c.h.b16 %v301
        %v729 = vunpack.c.l.b16 %v302
        %v730 = vunpack.c.h.b16 %v302
        %v731 = vunpack.c.l.b16 %v303
        %v732 = vunpack.c.l.b16 %v304
        %v733 = vunpack.c.h.b16 %v304
        %v734 = vunpack.c.l.b16 %v305
        %v735 = vunpack.c.h.b16 %v305
        %v736 = vunpack.c.l.b16 %v306
        %v737 = vunpack.c.l.b16 %v307
        %v738 = vunpack.c.h.b16 %v307
        %v739 = vunpack.c.l.b16 %v308
        %v740 = vunpack.c.h.b16 %v308
        %v741 = vunpack.c.l.b16 %v309
        %v742 = vunpack.c.l.b16 %v310
        %v743 = vunpack.c.h.b16 %v310
        %v744 = vunpack.c.l.b16 %v311
        %v745 = vunpack.c.h.b16 %v311
        %v746 = vunpack.c.l.b16 %v312
        %v747 = vunpack.c.l.b16 %v313
        %v748 = vunpack.c.h.b16 %v313
        %v749 = vunpack.c.l.b16 %v314
        %v750 = vunpack.c.h.b16 %v314
        %v751 = vunpack.c.l.b16 %v315
        %v752 = vunpack.c.l.b16 %v316
        %v753 = vunpack.c.h.b16 %v316
        %v754 = vunpack.c.l.b16 %v317
        %v755 = vunpack.c.h.b16 %v317
        %v756 = vunpack.c.l.b16 %v318
        %v757 = vunpack.c.l.b16 %v319
        %v758 = vunpack.c.h.b16 %v319
        %v759 = vunpack.c.l.b16 %v320
        %v760 = vunpack.c.h.b16 %v320
        %v761 = vunpack.c.l.b16 %v321
        %v762 = vunpack.c.l.b16 %v322
        %v763 = vunpack.c.h.b16 %v322
        %v764 = vunpack.c.l.b16 %v323
        %v765 = vunpack.c.h.b16 %v323
        %v766 = vunpack.c.l.b16 %v324
        %v767 = vunpack.c.l.b16 %v325
        %v768 = vunpack.c.h.b16 %v325
        %v769 = vunpack.c.l.b16 %v326
        %v770 = vunpack.c.h.b16 %v326
        %v771 = vunpack.c.l.b16 %v327
        %v772 = vunpack.c.l.b16 %v328
        %v773 = vunpack.c.h.b16 %v328
        %v774 = vunpack.c.l.b16 %v329
        %v775 = vunpack.c.h.b16 %v329
        %v776 = vunpack.c.l.b16 %v330
        %v777 = vunpack.c.l.b16 %v331
        %v778 = vunpack.c.h.b16 %v331
        %v779 = vunpack.c.l.b16 %v332
        %v780 = vunpack.c.h.b16 %v332
        %v781 = vunpack.c.l.b16 %v333
        %v782 = vunpack.c.l.b16 %v334
        %v783 = vunpack.c.h.b16 %v334
        %v784 = vunpack.c.l.b16 %v335
        %v785 = vunpack.c.h.b16 %v335
        %v786 = vunpack.c.l.b16 %v336
        %v787 = vunpack.c.l.b16 %v337
        %v788 = vunpack.c.h.b16 %v337
        %v789 = vunpack.c.l.b16 %v338
        %v790 = vunpack.c.h.b16 %v338
        %v791 = vunpack.c.l.b16 %v339
        %v792 = vunpack.c.l.b16 %v340
        %v793 = vunpack.c.h.b16 %v340
        %v794 = vunpack.c.l.b16 %v341
        %v795 = vunpack.c.h.b16 %v341
        %v796 = vunpack.c.l.b16 %v342
        %v797 = vunpack.c.l.b16 %v343
        %v798 = vunpack.c.h.b16 %v343
        %v799 = vunpack.c.l.b16 %v344
        %v800 = vunpack.c.h.b16 %v344
        %v801 = vunpack.c.l.b16 %v345
        %v802 = vunpack.c.l.b16 %v346
        %v803 = vunpack.c.h.b16 %v346
        %v804 = vunpack.c.l.b16 %v347
        %v805 = vunpack.c.h.b16 %v347
        %v806 = vunpack.c.l.b16 %v348
        %v807 = vunpack.c.l.b16 %v349
        %v808 = vunpack.c.h.b16 %v349
        %v809 = vunpack.c.l.b16 %v350
        %v810 = vunpack.c.h.b16 %v350
        %v811 = vunpack.c.l.b16 %v351
        %v812 = vunpack.c.l.b16 %v352
        %v813 = vunpack.c.h.b16 %v352
        %v814 = vunpack.c.l.b16 %v353
        %v815 = vunpack.c.h.b16 %v353
        %v816 = vunpack.c.l.b16 %v354
        %v817 = vunpack.c.l.b16 %v355
        %v818 = vunpack.c.h.b16 %v355
        %v819 = vunpack.c.l.b16 %v356
        %v820 = vunpack.c.h.b16 %v356
        %v821 = vunpack.c.l.b16 %v357
        %v822 = vunpack.c.l.b16 %v358
        %v823 = vunpack.c.h.b16 %v358
        %v824 = vunpack.c.l.b16 %v359
        %v825 = vunpack.c.h.b16 %v359
        %v826 = vunpack.c.l.b16 %v360
        %v827 = vunpack.c.l.b16 %v361
        %v828 = vunpack.c.h.b16 %v361
        %v829 = vunpack.c.l.b16 %v362
        %v830 = vunpack.c.h.b16 %v362
        %v831 = vunpack.c.l.b16 %v363
        %v832 = vunpack.c.l.b16 %v364
        %v833 = vunpack.c.h.b16 %v364
        %v834 = vunpack.c.l.b16 %v365
        %v835 = vunpack.c.h.b16 %v365
        %v836 = vunpack.c.l.b16 %v366
        %v837 = vunpack.c.l.b16 %v367
        %v838 = vunpack.c.h.b16 %v367
        %v839 = vunpack.c.l.b16 %v368
        %v840 = vunpack.c.h.b16 %v368
        %v841 = vunpack.c.l.b16 %v369
        %v842 = vunpack.c.l.b16 %v370
        %v843 = vunpack.c.h.b16 %v370
        %v844 = vunpack.c.l.b16 %v371
        %v845 = vunpack.c.h.b16 %v371
        %v846 = vunpack.c.l.b16 %v372
        %v847 = vunpack.c.l.b16 %v373
        %v848 = vunpack.c.h.b16 %v373
        %v849 = vunpack.c.l.b16 %v374
        %v850 = vunpack.c.h.b16 %v374
        %v851 = vunpack.c.l.b16 %v375
        %v852 = vunpack.c.l.b16 %v376
        %v853 = vunpack.c.h.b16 %v376
        %v854 = vunpack.c.l.b16 %v377
        %v855 = vunpack.c.h.b16 %v377
        %v856 = vunpack.c.l.b16 %v378
        %v857 = vunpack.c.l.b16 %v379
        %v858 = vunpack.c.h.b16 %v379
        %v859 = vunpack.c.l.b16 %v380
        %v860 = vunpack.c.h.b16 %v380
        %v861 = vunpack.c.l.b16 %v381
        %v862 = vunpack.c.l.b16 %v382
        %v863 = vunpack.c.h.b16 %v382
        %v864 = vunpack.c.l.b16 %v383
        %v865 = vunpack.c.h.b16 %v383
        %v866 = vunpack.c.l.b16 %v384
        %v867 = vunpack.c.l.b16 %v385
        %v868 = vunpack.c.h.b16 %v385
        %v869 = vunpack.c.l.b16 %v386
        %v870 = vunpack.c.h.b16 %v386
        %v871 = vunpack.c.l.b16 %v387
        %v872 = vunpack.c.l.b16 %v388
        %v873 = vunpack.c.h.b16 %v388
        %v874 = vunpack.c.l.b16 %v389
        %v875 = vunpack.c.h.b16 %v389
        %v876 = vunpack.c.l.b16 %v390
        %v877 = vunpack.c.l.b16 %v391
        %v878 = vunpack.c.h.b16 %v391
        %v879 = vunpack.c.l.b16 %v392
        %v880 = vunpack.c.h.b16 %v392
        %v881 = vunpack.c.l.b16 %v393
        %v882 = vunpack.c.l.b16 %v394
        %v883 = vunpack.c.h.b16 %v394
        %v884 = vunpack.c.l.b16 %v395
        %v885 = vunpack.c.h.b16 %v395
        %v886 = vunpack.c.l.b16 %v396
        %v887 = vunpack.c.l.b16 %v397
        %v888 = vunpack.c.h.b16 %v397
        %v889 = vunpack.c.l.b16 %v398
        %v890 = vunpack.c.h.b16 %v398
        %v891 = vunpack.c.l.b16 %v399
        %v892 = vunpack.c.l.b16 %v400
        %v893 = vunpack.c.h.b16 %v400
        %v894 = vunpack.c.l.b16 %v401
        %v895 = vunpack.c.h.b16 %v401
        %v896 = vunpack.c.l.b16 %v402
        %v897 = vunpack.c.l.b16 %v403
        %v898 = vunpack.c.h.b16 %v403
        %v899 = vunpack.c.l.b16 %v404
        %v900 = vunpack.c.h.b16 %v404
        %v901 = vunpack.c.l.b16 %v405
        %v902 = vunpack.c.l.b16 %v406
        %v903 = vunpack.c.h.b16 %v406
        %v904 = vunpack.c.l.b16 %v407
        %v905 = vunpack.c.h.b16 %v407
        %v906 = vunpack.c.l.b16 %v408
        %v907 = vunpack.c.l.b16 %v409
        %v908 = vunpack.c.h.b16 %v409
        %v909 = vunpack.c.l.b16 %v410
        %v910 = vunpack.c.h.b16 %v410
        %v911 = vunpack.c.l.b16 %v411
        %v912 = vunpack.c.l.b16 %v412
        %v913 = vunpack.c.h.b16 %v412
        %v914 = vunpack.c.l.b16 %v413
        %v915 = vunpack.c.h.b16 %v413
        %v916 = vunpack.c.l.b16 %v414
        %v917 = vunpack.c.l.b16 %v415
        %v918 = vunpack.c.h.b16 %v415
        %v919 = vunpack.c.l.b16 %v416
        %v920 = vunpack.c.h.b16 %v416
        %v921 = vunpack.c.l.b16 %v417
        %v922 = vunpack.c.l.b16 %v418
        %v923 = vunpack.c.h.b16 %v418
        %v924 = vunpack.c.l.b16 %v419
        %v925 = vunpack.c.h.b16 %v419
        %v926 = vunpack.c.l.b16 %v420
        %v927 = vunpack.c.l.b16 %v421
        %v928 = vunpack.c.h.b16 %v421
        %v929 = vunpack.c.l.b16 %v422
        %v930 = vunpack.c.h.b16 %v422
        %v931 = vunpack.c.l.b16 %v423
        %v932 = vunpack.c.l.b16 %v424
        %v933 = vunpack.c.h.b16 %v424
        %v934 = vunpack.c.l.b16 %v425
        %v935 = vunpack.c.h.b16 %v425
        %v936 = vunpack.c.l.b16 %v426
        %v937 = vunpack.c.l.b16 %v427
        %v938 = vunpack.c.h.b16 %v427
        %v939 = vunpack.c.l.b16 %v428
        %v940 = vunpack.c.h.b16 %v428
        %v941 = vunpack.c.l.b16 %v429
        %v942 = vunpack.c.l.b16 %v430
        %v943 = vunpack.c.h.b16 %v430
        %v944 = vunpack.c.l.b16 %v431
        %v945 = vunpack.c.h.b16 %v431
        %v946 = vunpack.c.l.b16 %v432
        %v947 = vunpack.c.l.b16 %v433
        %v948 = vunpack.c.h.b16 %v433
        %v949 = vunpack.c.l.b16 %v434
        %v950 = vunpack.c.h.b16 %v434
        %v951 = vunpack.c.l.b16 %v435
        %v952 = vunpack.c.l.b16 %v436
        %v953 = vunpack.c.h.b16 %v436
        %v954 = vunpack.c.l.b16 %v437
        %v955 = vunpack.c.h.b16 %v437
        %v956 = vunpack.c.l.b16 %v438
        %v957 = vunpack.c.l.b16 %v439
        %v958 = vunpack.c.h.b16 %v439
        %v959 = vunpack.c.l.b16 %v440
        %v960 = vunpack.c.h.b16 %v440
        %v961 = vunpack.c.l.b16 %v441
        %v962 = vunpack.c.l.b16 %v442
        %v963 = vunpack.c.h.b16 %v442
        %v964 = vunpack.c.l.b16 %v443
        %v965 = vunpack.c.h.b16 %v443
        %v966 = vunpack.c.l.b16 %v444
        %v967 = vunpack.c.l.b16 %v445
        %v968 = vunpack.c.h.b16 %v445
        %v969 = vunpack.c.l.b16 %v446
        %v970 = vunpack.c.h.b16 %v446
        %v971 = vunpack.c.l.b16 %v447
        %v972 = vunpack.c.l.b16 %v448
        %v973 = vunpack.c.h.b16 %v448
        %v974 = vunpack.c.l.b16 %v449
        %v975 = vunpack.c.h.b16 %v449
        %v976 = vunpack.c.l.b16 %v450
        %v977 = vunpack.c.l.b16 %v451
        %v978 = vunpack.c.h.b16 %v451
        %v979 = vunpack.c.l.b16 %v452
        %v980 = vunpack.c.h.b16 %v452
        %v981 = vunpack.c.l.b16 %v453
        %v982 = vunpack.c.l.b16 %v454
        %v983 = vunpack.c.h.b16 %v454
        %v984 = vunpack.c.l.b16 %v455
        %v985 = vunpack.c.h.b16 %v455
        %v986 = vunpack.c.l.b16 %v456
        %v987 = vunpack.c.l.b16 %v457
        %v988 = vunpack.c.h.b16 %v457
        %v989 = vunpack.c.l.b16 %v458
        %v990 = vunpack.c.h.b16 %v458
        %v991 = vunpack.c.l.b16 %v459
        %v992 = vpack.c.b16 %v677, %v672
        %v993 = vpack.c.b16 %v678, %v673
        %v994 = vpack.c.b16 %v679, %v674
        %v995 = vpack.c.b16 %v680, %v675
        %v996 = vpack.c.b16 %v681, %v676
        %v997 = vpack.c.b16 %v687, %v682
        %v998 = vpack.c.b16 %v688, %v683
        %v999 = vpack.c.b16 %v689, %v684
        %v1000 = vpack.c.b16 %v690, %v685
        %v1001 = vpack.c.b16 %v691, %v686
        %v1002 = vpack.c.b16 %v697, %v692
        %v1003 = vpack.c.b16 %v698, %v693
        %v1004 = vpack.c.b16 %v699, %v694
        %v1005 = vpack.c.b16 %v700, %v695
        %v1006 = vpack.c.b16 %v701, %v696
        %v1007 = vpack.c.b16 %v707, %v702
        %v1008 = vpack.c.b16 %v708, %v703
        %v1009 = vpack.c.b16 %v709, %v704
        %v1010 = vpack.c.b16 %v710, %v705
        %v1011 = vpack.c.b16 %v711, %v706
        %v1012 = vpack.c.b16 %v717, %v712
        %v1013 = vpack.c.b16 %v718, %v713
        %v1014 = vpack.c.b16 %v719, %v714
        %v1015 = vpack.c.b16 %v720, %v715
        %v1016 = vpack.c.b16 %v721, %v716
        %v1017 = vpack.c.b16 %v727, %v722
        %v1018 = vpack.c.b16 %v728, %v723
        %v1019 = vpack.c.b16 %v729, %v724
        %v1020 = vpack.c.b16 %v730, %v725
        %v1021 = vpack.c.b16 %v731, %v726
        %v1022 = vpack.c.b16 %v737, %v732
        %v1023 = vpack.c.b16 %v738, %v733
        %v1024 = vpack.c.b16 %v739, %v734
        %v1025 = vpack.c.b16 %v740, %v735
        %v1026 = vpack.c.b16 %v741, %v736
        %v1027 = vpack.c.b16 %v747, %v742
        %v1028 = vpack.c.b16 %v748, %v743
        %v1029 = vpack.c.b16 %v749, %v744
        %v1030 = vpack.c.b16 %v750, %v745
        %v1031 = vpack.c.b16 %v751, %v746
        %v1032 = vpack.c.b16 %v757, %v752
        %v1033 = vpack.c.b16 %v758, %v753
        %v1034 = vpack.c.b16 %v759, %v754
        %v1035 = vpack.c.b16 %v760, %v755
        %v1036 = vpack.c.b16 %v761, %v756
        %v1037 = vpack.c.b16 %v767, %v762
        %v1038 = vpack.c.b16 %v768, %v763
        %v1039 = vpack.c.b16 %v769, %v764
        %v1040 = vpack.c.b16 %v770, %v765
        %v1041 = vpack.c.b16 %v771, %v766
        %v1042 = vpack.c.b16 %v777, %v772
        %v1043 = vpack.c.b16 %v778, %v773
        %v1044 = vpack.c.b16 %v779, %v774
        %v1045 = vpack.c.b16 %v780, %v775
        %v1046 = vpack.c.b16 %v781, %v776
        %v1047 = vpack.c.b16 %v787, %v782
        %v1048 = vpack.c.b16 %v788, %v783
        %v1049 = vpack.c.b16 %v789, %v784
        %v1050 = vpack.c.b16 %v790, %v785
        %v1051 = vpack.c.b16 %v791, %v786
        %v1052 = vpack.c.b16 %v797, %v792
        %v1053 = vpack.c.b16 %v798, %v793
        %v1054 = vpack.c.b16 %v799, %v794
        %v1055 = vpack.c.b16 %v800, %v795
        %v1056 = vpack.c.b16 %v801, %v796
        %v1057 = vpack.c.b16 %v807, %v802
        %v1058 = vpack.c.b16 %v808, %v803
        %v1059 = vpack.c.b16 %v809, %v804
        %v1060 = vpack.c.b16 %v810, %v805
        %v1061 = vpack.c.b16 %v811, %v806
        %v1062 = vpack.c.b16 %v817, %v812
        %v1063 = vpack.c.b16 %v818, %v813
        %v1064 = vpack.c.b16 %v819, %v814
        %v1065 = vpack.c.b16 %v820, %v815
        %v1066 = vpack.c.b16 %v821, %v816
        %v1067 = vpack.c.b16 %v827, %v822
        %v1068 = vpack.c.b16 %v828, %v823
        %v1069 = vpack.c.b16 %v829, %v824
        %v1070 = vpack.c.b16 %v830, %v825
        %v1071 = vpack.c.b16 %v831, %v826
        %v1072 = vpack.c.b16 %v837, %v832
        %v1073 = vpack.c.b16 %v838, %v833
        %v1074 = vpack.c.b16 %v839, %v834
        %v1075 = vpack.c.b16 %v840, %v835
        %v1076 = vpack.c.b16 %v841, %v836
        %v1077 = vpack.c.b16 %v847, %v842
        %v1078 = vpack.c.b16 %v848, %v843
        %v1079 = vpack.c.b16 %v849, %v844
        %v1080 = vpack.c.b16 %v850, %v845
        %v1081 = vpack.c.b16 %v851, %v846
        %v1082 = vpack.c.b16 %v857, %v852
        %v1083 = vpack.c.b16 %v858, %v853
        %v1084 = vpack.c.b16 %v859, %v854
        %v1085 = vpack.c.b16 %v860, %v855
        %v1086 = vpack.c.b16 %v861, %v856
        %v1087 = vpack.c.b16 %v867, %v862
        %v1088 = vpack.c.b16 %v868, %v863
        %v1089 = vpack.c.b16 %v869, %v864
        %v1090 = vpack.c.b16 %v870, %v865
        %v1091 = vpack.c.b16 %v871, %v866
        %v1092 = vpack.c.b16 %v877, %v872
        %v1093 = vpack.c.b16 %v878, %v873
        %v1094 = vpack.c.b16 %v879, %v874
        %v1095 = vpack.c.b16 %v880, %v875
        %v1096 = vpack.c.b16 %v881, %v876
        %v1097 = vpack.c.b16 %v887, %v882
        %v1098 = vpack.c.b16 %v888, %v883
        %v1099 = vpack.c.b16 %v889, %v884
        %v1100 = vpack.c.b16 %v890, %v885
        %v1101 = vpack.c.b16 %v891, %v886
        %v1102 = vpack.c.b16 %v897, %v892
        %v1103 = vpack.c.b16 %v898, %v893
        %v1104 = vpack.c.b16 %v899, %v894
        %v1105 = vpack.c.b16 %v900, %v895
        %v1106 = vpack.c.b16 %v901, %v896
        %v1107 = vpack.c.b16 %v907, %v902
        %v1108 = vpack.c.b16 %v908, %v903
        %v1109 = vpack.c.b16 %v909, %v904
        %v1110 = vpack.c.b16 %v910, %v905
        %v1111 = vpack.c.b16 %v911, %v906
        %v1112 = vpack.c.b16 %v917, %v912
        %v1113 = vpack.c.b16 %v918, %v913
        %v1114 = vpack.c.b16 %v919, %v914
        %v1115 = vpack.c.b16 %v920, %v915
        %v1116 = vpack.c.b16 %v921, %v916
        %v1117 = vpack.c.b16 %v927, %v922
        %v1118 = vpack.c.b16 %v928, %v923
        %v1119 = vpack.c.b16 %v929, %v924
        %v1120 = vpack.c.b16 %v930, %v925
        %v1121 = vpack.c.b16 %v931, %v926
        %v1122 = vpack.c.b16 %v937, %v932
        %v1123 = vpack.c.b16 %v938, %v933
        %v1124 = vpack.c.b16 %v939, %v934
        %v1125 = vpack.c.b16 %v940, %v935
        %v1126 = vpack.c.b16 %v941, %v936
        %v1127 = vpack.c.b16 %v947, %v942
        %v1128 = vpack.c.b16 %v948, %v943
        %v1129 = vpack.c.b16 %v949, %v944
        %v1130 = vpack.c.b16 %v950, %v945
        %v1131 = vpack.c.b16 %v951, %v946
        %v1132 = vpack.c.b16 %v957, %v952
        %v1133 = vpack.c.b16 %v958, %v953
        %v1134 = vpack.c.b16 %v959, %v954
        %v1135 = vpack.c.b16 %v960, %v955
        %v1136 = vpack.c.b16 %v961, %v956
        %v1137 = vpack.c.b16 %v967, %v962
        %v1138 = vpack.c.b16 %v968, %v963
        %v1139 = vpack.c.b16 %v969, %v964
        %v1140 = vpack.c.b16 %v970, %v965
        %v1141 = vpack.c.b16 %v971, %v966
        %v1142 = vpack.c.b16 %v977, %v972
        %v1143 = vpack.c.b16 %v978, %v973
        %v1144 = vpack.c.b16 %v979, %v974
        %v1145 = vpack.c.b16 %v980, %v975
        %v1146 = vpack.c.b16 %v981, %v976
        %v1147 = vpack.c.b16 %v987, %v982
        %v1148 = vpack.c.b16 %v988, %v983
        %v1149 = vpack.c.b16 %v989, %v984
        %v1150 = vpack.c.b16 %v990, %v985
        %v1151 = vpack.c.b16 %v991, %v986
        %1312 = vmatprep.subr.bf16.mxu0 %v993
        %1313 = vmatpush1.bf16.msra.mxu0 %v992
        %1314 = vmatprep.subr.bf16.mxu0 %v998
        %1315 = vmatpush1.bf16.msra.mxu0 %v997
        %1316 = vmatprep.subr.bf16.mxu0 %v1003
        %1317 = vmatpush1.bf16.msra.mxu0 %v1002
        %1318 = vmatprep.subr.bf16.mxu0 %v1008
        %1319 = vmatpush1.bf16.msra.mxu0 %v1007
        %1320 = vmatprep.subr.bf16.mxu0 %v1013
        %1321 = vmatpush1.bf16.msra.mxu0 %v1012
        %1322 = vmatprep.subr.bf16.mxu0 %v1018
        %1323 = vmatpush1.bf16.msra.mxu0 %v1017
        %1324 = vmatprep.subr.bf16.mxu0 %v1023
        %1325 = vmatpush1.bf16.msra.mxu0 %v1022
        %1326 = vmatprep.subr.bf16.mxu0 %v1028
        %1327 = vmatpush1.bf16.msra.mxu0 %v1027
        %1328 = vmatprep.subr.bf16.mxu0 %v1033
        %1329 = vmatpush1.bf16.msra.mxu0 %v1032
        %1330 = vmatprep.subr.bf16.mxu0 %v1038
        %1331 = vmatpush1.bf16.msra.mxu0 %v1037
        %1332 = vmatprep.subr.bf16.mxu0 %v1043
        %1333 = vmatpush1.bf16.msra.mxu0 %v1042
        %1334 = vmatprep.subr.bf16.mxu0 %v1048
        %1335 = vmatpush1.bf16.msra.mxu0 %v1047
        %1336 = vmatprep.subr.bf16.mxu0 %v1053
        %1337 = vmatpush1.bf16.msra.mxu0 %v1052
        %1338 = vmatprep.subr.bf16.mxu0 %v1058
        %1339 = vmatpush1.bf16.msra.mxu0 %v1057
        %1340 = vmatprep.subr.bf16.mxu0 %v1063
        %1341 = vmatpush1.bf16.msra.mxu0 %v1062
        %1342 = vmatprep.subr.bf16.mxu0 %v1068
        %1343 = vmatpush1.bf16.msra.mxu0 %v1067
        %1344 = vmatprep.mubr.bf16.mxu0 %v473
        %1345 = vmatmul.mubr.bf16.gmra.mrb[0].mxu0 %v472
        %v1346 = vpop.f32.mrb[0].mxu0
        %v1347 = vadd.f32 0.0, %v1346
        %v1348 = vpop.f32.mrb[0].mxu0
        %v1349 = vadd.f32 0.0, %v1348
        %v1350 = vpop.f32.mrb[0].mxu0
        %v1351 = vadd.f32 0.0, %v1350
        %v1352 = vpop.f32.mrb[0].mxu0
        %v1353 = vadd.f32 0.0, %v1352
        %1354 = vdwg.mxu0
        %1355 = vmatprep.subr.bf16.mxu0 %v1073
        %1356 = vmatpush1.bf16.msra.mxu0 %v1072
        %1357 = vmatprep.subr.bf16.mxu0 %v1078
        %1358 = vmatpush1.bf16.msra.mxu0 %v1077
        %1359 = vmatprep.subr.bf16.mxu0 %v1083
        %1360 = vmatpush1.bf16.msra.mxu0 %v1082
        %1361 = vmatprep.subr.bf16.mxu0 %v1088
        %1362 = vmatpush1.bf16.msra.mxu0 %v1087
        %1363 = vmatprep.subr.bf16.mxu0 %v1093
        %1364 = vmatpush1.bf16.msra.mxu0 %v1092
        %1365 = vmatprep.subr.bf16.mxu0 %v1098
        %1366 = vmatpush1.bf16.msra.mxu0 %v1097
        %1367 = vmatprep.subr.bf16.mxu0 %v1103
        %1368 = vmatpush1.bf16.msra.mxu0 %v1102
        %1369 = vmatprep.subr.bf16.mxu0 %v1108
        %1370 = vmatpush1.bf16.msra.mxu0 %v1107
        %1371 = vmatprep.subr.bf16.mxu0 %v1113
        %1372 = vmatpush1.bf16.msra.mxu0 %v1112
        %1373 = vmatprep.subr.bf16.mxu0 %v1118
        %1374 = vmatpush1.bf16.msra.mxu0 %v1117
        %1375 = vmatprep.subr.bf16.mxu0 %v1123
        %1376 = vmatpush1.bf16.msra.mxu0 %v1122
        %1377 = vmatprep.subr.bf16.mxu0 %v1128
        %1378 = vmatpush1.bf16.msra.mxu0 %v1127
        %1379 = vmatprep.subr.bf16.mxu0 %v1133
        %1380 = vmatpush1.bf16.msra.mxu0 %v1132
        %1381 = vmatprep.subr.bf16.mxu0 %v1138
        %1382 = vmatpush1.bf16.msra.mxu0 %v1137
        %1383 = vmatprep.subr.bf16.mxu0 %v1143
        %1384 = vmatpush1.bf16.msra.mxu0 %v1142
        %1385 = vmatprep.subr.bf16.mxu0 %v1148
        %1386 = vmatpush1.bf16.msra.mxu0 %v1147
        %1387 = vmatprep.mubr.bf16.mxu0 %v475
        %1388 = vmatmul.mubr.bf16.gmra.mrb[0].mxu0 %v474
        %v1389 = vpop.f32.mrb[0].mxu0
        %v1390 = vadd.f32 %v1347, %v1389
        %v1391 = vpop.f32.mrb[0].mxu0
        %v1392 = vadd.f32 %v1349, %v1391
        %v1393 = vpop.f32.mrb[0].mxu0
        %v1394 = vadd.f32 %v1351, %v1393
        %v1395 = vpop.f32.mrb[0].mxu0
        %v1396 = vadd.f32 %v1353, %v1395
        %1397 = vdwg.mxu0
        %1398 = vmatprep.subr.bf16.mxu0 %v995
        %1399 = vmatpush1.bf16.msra.mxu0 %v994
        %1400 = vmatprep.subr.bf16.mxu0 %v1000
        %1401 = vmatpush1.bf16.msra.mxu0 %v999
        %1402 = vmatprep.subr.bf16.mxu0 %v1005
        %1403 = vmatpush1.bf16.msra.mxu0 %v1004
        %1404 = vmatprep.subr.bf16.mxu0 %v1010
        %1405 = vmatpush1.bf16.msra.mxu0 %v1009
        %1406 = vmatprep.subr.bf16.mxu0 %v1015
        %1407 = vmatpush1.bf16.msra.mxu0 %v1014
        %1408 = vmatprep.subr.bf16.mxu0 %v1020
        %1409 = vmatpush1.bf16.msra.mxu0 %v1019
        %1410 = vmatprep.subr.bf16.mxu0 %v1025
        %1411 = vmatpush1.bf16.msra.mxu0 %v1024
        %1412 = vmatprep.subr.bf16.mxu0 %v1030
        %1413 = vmatpush1.bf16.msra.mxu0 %v1029
        %1414 = vmatprep.subr.bf16.mxu0 %v1035
        %1415 = vmatpush1.bf16.msra.mxu0 %v1034
        %1416 = vmatprep.subr.bf16.mxu0 %v1040
        %1417 = vmatpush1.bf16.msra.mxu0 %v1039
        %1418 = vmatprep.subr.bf16.mxu0 %v1045
        %1419 = vmatpush1.bf16.msra.mxu0 %v1044
        %1420 = vmatprep.subr.bf16.mxu0 %v1050
        %1421 = vmatpush1.bf16.msra.mxu0 %v1049
        %1422 = vmatprep.subr.bf16.mxu0 %v1055
        %1423 = vmatpush1.bf16.msra.mxu0 %v1054
        %1424 = vmatprep.subr.bf16.mxu0 %v1060
        %1425 = vmatpush1.bf16.msra.mxu0 %v1059
        %1426 = vmatprep.subr.bf16.mxu0 %v1065
        %1427 = vmatpush1.bf16.msra.mxu0 %v1064
        %1428 = vmatprep.subr.bf16.mxu0 %v1070
        %1429 = vmatpush1.bf16.msra.mxu0 %v1069
        %1430 = vmatprep.mubr.bf16.mxu0 %v473
        %1431 = vmatmul.mubr.bf16.gmra.mrb[0].mxu0 %v472
        %v1432 = vpop.f32.mrb[0].mxu0
        %v1433 = vadd.f32 0.0, %v1432
        %v1434 = vpop.f32.mrb[0].mxu0
        %v1435 = vadd.f32 0.0, %v1434
        %v1436 = vpop.f32.mrb[0].mxu0
        %v1437 = vadd.f32 0.0, %v1436
        %v1438 = vpop.f32.mrb[0].mxu0
        %v1439 = vadd.f32 0.0, %v1438
        %1440 = vdwg.mxu0
        %1441 = vmatprep.subr.bf16.mxu0 %v1075
        %1442 = vmatpush1.bf16.msra.mxu0 %v1074
        %1443 = vmatprep.subr.bf16.mxu0 %v1080
        %1444 = vmatpush1.bf16.msra.mxu0 %v1079
        %1445 = vmatprep.subr.bf16.mxu0 %v1085
        %1446 = vmatpush1.bf16.msra.mxu0 %v1084
        %1447 = vmatprep.subr.bf16.mxu0 %v1090
        %1448 = vmatpush1.bf16.msra.mxu0 %v1089
        %1449 = vmatprep.subr.bf16.mxu0 %v1095
        %1450 = vmatpush1.bf16.msra.mxu0 %v1094
        %1451 = vmatprep.subr.bf16.mxu0 %v1100
        %1452 = vmatpush1.bf16.msra.mxu0 %v1099
        %1453 = vmatprep.subr.bf16.mxu0 %v1105
        %1454 = vmatpush1.bf16.msra.mxu0 %v1104
        %1455 = vmatprep.subr.bf16.mxu0 %v1110
        %1456 = vmatpush1.bf16.msra.mxu0 %v1109
        %1457 = vmatprep.subr.bf16.mxu0 %v1115
        %1458 = vmatpush1.bf16.msra.mxu0 %v1114
        %1459 = vmatprep.subr.bf16.mxu0 %v1120
        %1460 = vmatpush1.bf16.msra.mxu0 %v1119
        %1461 = vmatprep.subr.bf16.mxu0 %v1125
        %1462 = vmatpush1.bf16.msra.mxu0 %v1124
        %1463 = vmatprep.subr.bf16.mxu0 %v1130
        %1464 = vmatpush1.bf16.msra.mxu0 %v1129
        %1465 = vmatprep.subr.bf16.mxu0 %v1135
        %1466 = vmatpush1.bf16.msra.mxu0 %v1134
        %1467 = vmatprep.subr.bf16.mxu0 %v1140
        %1468 = vmatpush1.bf16.msra.mxu0 %v1139
        %1469 = vmatprep.subr.bf16.mxu0 %v1145
        %1470 = vmatpush1.bf16.msra.mxu0 %v1144
        %1471 = vmatprep.subr.bf16.mxu0 %v1150
        %1472 = vmatpush1.bf16.msra.mxu0 %v1149
        %1473 = vmatprep.mubr.bf16.mxu0 %v475
        %1474 = vmatmul.mubr.bf16.gmra.mrb[0].mxu0 %v474
        %v1475 = vpop.f32.mrb[0].mxu0
        %v1476 = vadd.f32 %v1433, %v1475
        %v1477 = vpop.f32.mrb[0].mxu0
        %v1478 = vadd.f32 %v1435, %v1477
        %v1479 = vpop.f32.mrb[0].mxu0
        %v1480 = vadd.f32 %v1437, %v1479
        %v1481 = vpop.f32.mrb[0].mxu0
        %v1482 = vadd.f32 %v1439, %v1481
        %1483 = vdwg.mxu0
        %1484 = vmatprep.subr.bf16.mxu0 0
        %1485 = vmatpush1.bf16.msra.mxu0 %v996
        %1486 = vmatprep.subr.bf16.mxu0 0
        %1487 = vmatpush1.bf16.msra.mxu0 %v1001
        %1488 = vmatprep.subr.bf16.mxu0 0
        %1489 = vmatpush1.bf16.msra.mxu0 %v1006
        %1490 = vmatprep.subr.bf16.mxu0 0
        %1491 = vmatpush1.bf16.msra.mxu0 %v1011
        %1492 = vmatprep.subr.bf16.mxu0 0
        %1493 = vmatpush1.bf16.msra.mxu0 %v1016
        %1494 = vmatprep.subr.bf16.mxu0 0
        %1495 = vmatpush1.bf16.msra.mxu0 %v1021
        %1496 = vmatprep.subr.bf16.mxu0 0
        %1497 = vmatpush1.bf16.msra.mxu0 %v1026
        %1498 = vmatprep.subr.bf16.mxu0 0
        %1499 = vmatpush1.bf16.msra.mxu0 %v1031
        %1500 = vmatprep.subr.bf16.mxu0 0
        %1501 = vmatpush1.bf16.msra.mxu0 %v1036
        %1502 = vmatprep.subr.bf16.mxu0 0
        %1503 = vmatpush1.bf16.msra.mxu0 %v1041
        %1504 = vmatprep.subr.bf16.mxu0 0
        %1505 = vmatpush1.bf16.msra.mxu0 %v1046
        %1506 = vmatprep.subr.bf16.mxu0 0
        %1507 = vmatpush1.bf16.msra.mxu0 %v1051
        %1508 = vmatprep.subr.bf16.mxu0 0
        %1509 = vmatpush1.bf16.msra.mxu0 %v1056
        %1510 = vmatprep.subr.bf16.mxu0 0
        %1511 = vmatpush1.bf16.msra.mxu0 %v1061
        %1512 = vmatprep.subr.bf16.mxu0 0
        %1513 = vmatpush1.bf16.msra.mxu0 %v1066
        %1514 = vmatprep.subr.bf16.mxu0 0
        %1515 = vmatpush1.bf16.msra.mxu0 %v1071
        %1516 = vmatprep.mubr.bf16.mxu0 %v473
        %1517 = vmatmul.mubr.bf16.gmra.mrb[0].mxu0 %v472
        %v1518 = vpop.f32.mrb[0].mxu0
        %v1519 = vadd.f32 0.0, %v1518
        %v1520 = vpop.f32.mrb[0].mxu0
        %v1521 = vpop.f32.mrb[0].mxu0
        %v1522 = vadd.f32 0.0, %v1521
        %v1523 = vpop.f32.mrb[0].mxu0
        %1524 = vdwg.mxu0
        %1525 = vmatprep.subr.bf16.mxu0 0
        %1526 = vmatpush1.bf16.msra.mxu0 %v1076
        %1527 = vmatprep.subr.bf16.mxu0 0
        %1528 = vmatpush1.bf16.msra.mxu0 %v1081
        %1529 = vmatprep.subr.bf16.mxu0 0
        %1530 = vmatpush1.bf16.msra.mxu0 %v1086
        %1531 = vmatprep.subr.bf16.mxu0 0
        %1532 = vmatpush1.bf16.msra.mxu0 %v1091
        %1533 = vmatprep.subr.bf16.mxu0 0
        %1534 = vmatpush1.bf16.msra.mxu0 %v1096
        %1535 = vmatprep.subr.bf16.mxu0 0
        %1536 = vmatpush1.bf16.msra.mxu0 %v1101
        %1537 = vmatprep.subr.bf16.mxu0 0
        %1538 = vmatpush1.bf16.msra.mxu0 %v1106
        %1539 = vmatprep.subr.bf16.mxu0 0
        %1540 = vmatpush1.bf16.msra.mxu0 %v1111
        %1541 = vmatprep.subr.bf16.mxu0 0
        %1542 = vmatpush1.bf16.msra.mxu0 %v1116
        %1543 = vmatprep.subr.bf16.mxu0 0
        %1544 = vmatpush1.bf16.msra.mxu0 %v1121
        %1545 = vmatprep.subr.bf16.mxu0 0
        %1546 = vmatpush1.bf16.msra.mxu0 %v1126
        %1547 = vmatprep.subr.bf16.mxu0 0
        %1548 = vmatpush1.bf16.msra.mxu0 %v1131
        %1549 = vmatprep.subr.bf16.mxu0 0
        %1550 = vmatpush1.bf16.msra.mxu0 %v1136
        %1551 = vmatprep.subr.bf16.mxu0 0
        %1552 = vmatpush1.bf16.msra.mxu0 %v1141
        %1553 = vmatprep.subr.bf16.mxu0 0
        %1554 = vmatpush1.bf16.msra.mxu0 %v1146
        %1555 = vmatprep.subr.bf16.mxu0 0
        %1556 = vmatpush1.bf16.msra.mxu0 %v1151
        %1557 = vmatprep.mubr.bf16.mxu0 %v475
        %1558 = vmatmul.mubr.bf16.gmra.mrb[0].mxu0 %v474
        %v1559 = vpop.f32.mrb[0].mxu0
        %v1560 = vadd.f32 %v1519, %v1559
        %v1561 = vpop.f32.mrb[0].mxu0
        %v1562 = vpop.f32.mrb[0].mxu0
        %v1563 = vadd.f32 %v1522, %v1562
        %v1564 = vpop.f32.mrb[0].mxu0
        %1565 = vdwg.mxu0
        %v1566 = vmul.f32 %v1390, %v1390
        %v1567 = vmul.f32 %v1392, %v1392
        %v1568 = vmul.f32 %v1476, %v1476
        %v1569 = vmul.f32 %v1478, %v1478
        %v1570 = vmul.f32 %v1560, %v1560
        %v1571 = vmul.f32 %v1394, %v1394
        %v1572 = vmul.f32 %v1396, %v1396
        %v1573 = vmul.f32 %v1480, %v1480
        %v1574 = vmul.f32 %v1482, %v1482
        %v1575 = vmul.f32 %v1563, %v1563
        %v1576 = vpack.c.bf16 %v1571, %v1566
        %v1577 = vpack.c.bf16 %v1572, %v1567
        %v1578 = vpack.c.bf16 %v1573, %v1568
        %v1579 = vpack.c.bf16 %v1574, %v1569
        %v1580 = vpack.c.bf16 %v1575, %v1570
        %v1581 = vld [vmem:[#allocation7] sm:$0xf]
        %v1582 = vld [vmem:[#allocation7 + $0x4] sm:$0xf]
        %v1583 = vld [vmem:[#allocation7 + $0x8] sm:$0xf]
        %v1584 = vld [vmem:[#allocation7 + $0xc] sm:$0xf]
        %v1585 = vld [vmem:[#allocation7 + $0x10] sm:$0xf]
        %v1586 = vld [vmem:[#allocation7 + $0x14] sm:$0xf]
        %v1587 = vld [vmem:[#allocation7 + $0x18] sm:$0xf]
        %v1588 = vld [vmem:[#allocation7 + $0x1c] sm:$0xf]
        %v1589 = vld [vmem:[#allocation7 + $0x20] sm:$0xf]
        %v1590 = vld [vmem:[#allocation7 + $0x24] sm:$0xf]
        %v1591 = vld [vmem:[#allocation7 + $0x28] sm:$0xf]
        %v1592 = vld [vmem:[#allocation7 + $0x2c] sm:$0xf]
        %v1593 = vld [vmem:[#allocation7 + $0x30] sm:$0xf]
        %v1594 = vld [vmem:[#allocation7 + $0x34] sm:$0xf]
        %v1595 = vld [vmem:[#allocation7 + $0x38] sm:$0xf]
        %v1596 = vld [vmem:[#allocation7 + $0x3c] sm:$0xf]
        %v1597 = vld [vmem:[#allocation7 + $0x40] sm:$0xf]
        %v1598 = vld [vmem:[#allocation7 + $0x44] sm:$0xf]
        %v1599 = vld [vmem:[#allocation7 + $0x48] sm:$0xf]
        %v1600 = vld [vmem:[#allocation7 + $0x4c] sm:$0xf]
        %v1601 = vld [vmem:[#allocation7 + $0x50] sm:$0xf]
        %v1602 = vld [vmem:[#allocation7 + $0x54] sm:$0xf]
        %v1603 = vld [vmem:[#allocation7 + $0x58] sm:$0xf]
        %v1604 = vld [vmem:[#allocation7 + $0x5c] sm:$0xf]
        %v1605 = vld [vmem:[#allocation7 + $0x60] sm:$0xf]
        %v1606 = vld [vmem:[#allocation7 + $0x64] sm:$0xf]
        %v1607 = vld [vmem:[#allocation7 + $0x68] sm:$0xf]
        %v1608 = vld [vmem:[#allocation7 + $0x6c] sm:$0xf]
        %v1609 = vld [vmem:[#allocation7 + $0x70] sm:$0xf]
        %v1610 = vld [vmem:[#allocation7 + $0x74] sm:$0xf]
        %v1611 = vld [vmem:[#allocation7 + $0x78] sm:$0xf]
        %v1612 = vld [vmem:[#allocation7 + $0x7c] sm:$0xf]
        %v1613 = vld [vmem:[#allocation7 + $0x80] sm:$0xf]
        %v1614 = vld [vmem:[#allocation7 + $0x84] sm:$0xf]
        %v1615 = vld [vmem:[#allocation7 + $0x88] sm:$0xf]
        %v1616 = vld [vmem:[#allocation7 + $0x8c] sm:$0xf]
        %v1617 = vld [vmem:[#allocation7 + $0x90] sm:$0xf]
        %v1618 = vld [vmem:[#allocation7 + $0x94] sm:$0xf]
        %v1619 = vld [vmem:[#allocation7 + $0x98] sm:$0xf]
        %v1620 = vld [vmem:[#allocation7 + $0x9c] sm:$0xf]
        %v1621 = vld [vmem:[#allocation7 + $0xa0] sm:$0xf]
        %v1622 = vld [vmem:[#allocation7 + $0xa4] sm:$0xf]
        %v1623 = vld [vmem:[#allocation7 + $0xa8] sm:$0xf]
        %v1624 = vld [vmem:[#allocation7 + $0xac] sm:$0xf]
        %v1625 = vld [vmem:[#allocation7 + $0xb0] sm:$0xf]
        %v1626 = vld [vmem:[#allocation7 + $0xb4] sm:$0xf]
        %v1627 = vld [vmem:[#allocation7 + $0xb8] sm:$0xf]
        %v1628 = vld [vmem:[#allocation7 + $0xbc] sm:$0xf]
        %v1629 = vld [vmem:[#allocation7 + $0xc0] sm:$0xf]
        %v1630 = vld [vmem:[#allocation7 + $0xc4] sm:$0xf]
        %v1631 = vld [vmem:[#allocation7 + $0xc8] sm:$0xf]
        %v1632 = vld [vmem:[#allocation7 + $0xcc] sm:$0xf]
        %v1633 = vld [vmem:[#allocation7 + $0xd0] sm:$0xf]
        %v1634 = vld [vmem:[#allocation7 + $0xd4] sm:$0xf]
        %v1635 = vld [vmem:[#allocation7 + $0xd8] sm:$0xf]
        %v1636 = vld [vmem:[#allocation7 + $0xdc] sm:$0xf]
        %v1637 = vld [vmem:[#allocation7 + $0xe0] sm:$0xf]
        %v1638 = vld [vmem:[#allocation7 + $0xe4] sm:$0xf]
        %v1639 = vld [vmem:[#allocation7 + $0xe8] sm:$0xf]
        %v1640 = vld [vmem:[#allocation7 + $0xec] sm:$0xf]
        %v1641 = vld [vmem:[#allocation7 + $0xf0] sm:$0xf]
        %v1642 = vld [vmem:[#allocation7 + $0xf4] sm:$0xf]
        %v1643 = vld [vmem:[#allocation7 + $0xf8] sm:$0xf]
        %v1644 = vld [vmem:[#allocation7 + $0xfc] sm:$0xf]
        %v1645 = vld [vmem:[#allocation7 + $0x100] sm:$0xf]
        %v1646 = vld [vmem:[#allocation7 + $0x104] sm:$0xf]
        %v1647 = vld [vmem:[#allocation7 + $0x108] sm:$0xf]
        %v1648 = vld [vmem:[#allocation7 + $0x10c] sm:$0xf]
        %v1649 = vld [vmem:[#allocation7 + $0x110] sm:$0xf]
        %v1650 = vld [vmem:[#allocation7 + $0x114] sm:$0xf]
        %v1651 = vld [vmem:[#allocation7 + $0x118] sm:$0xf]
        %v1652 = vld [vmem:[#allocation7 + $0x11c] sm:$0xf]
        %v1653 = vld [vmem:[#allocation7 + $0x120] sm:$0xf]
        %v1654 = vld [vmem:[#allocation7 + $0x124] sm:$0xf]
        %v1655 = vld [vmem:[#allocation7 + $0x128] sm:$0xf]
        %v1656 = vld [vmem:[#allocation7 + $0x12c] sm:$0xf]
        %v1657 = vld [vmem:[#allocation7 + $0x130] sm:$0xf]
        %v1658 = vld [vmem:[#allocation7 + $0x134] sm:$0xf]
        %v1659 = vld [vmem:[#allocation7 + $0x138] sm:$0xf]
        %v1660 = vld [vmem:[#allocation7 + $0x13c] sm:$0xf]
        %v1741 = vunpack.c.l.b16 %v1581
        %v1742 = vunpack.c.l.b16 %v1582
        %v1743 = vunpack.c.l.b16 %v1583
        %v1744 = vunpack.c.l.b16 %v1584
        %v1745 = vunpack.c.l.b16 %v1585
        %v1746 = vunpack.c.l.b16 %v1586
        %v1747 = vunpack.c.l.b16 %v1587
        %v1748 = vunpack.c.l.b16 %v1588
        %v1749 = vunpack.c.l.b16 %v1589
        %v1750 = vunpack.c.l.b16 %v1590
        %v1751 = vunpack.c.l.b16 %v1591
        %v1752 = vunpack.c.l.b16 %v1592
        %v1753 = vunpack.c.l.b16 %v1593
        %v1754 = vunpack.c.l.b16 %v1594
        %v1755 = vunpack.c.l.b16 %v1595
        %v1756 = vunpack.c.l.b16 %v1596
        %v1757 = vunpack.c.l.b16 %v1597
        %v1758 = vunpack.c.l.b16 %v1598
        %v1759 = vunpack.c.l.b16 %v1599
        %v1760 = vunpack.c.l.b16 %v1600
        %v1761 = vunpack.c.l.b16 %v1601
        %v1762 = vunpack.c.l.b16 %v1602
        %v1763 = vunpack.c.l.b16 %v1603
        %v1764 = vunpack.c.l.b16 %v1604
        %v1765 = vunpack.c.l.b16 %v1605
        %v1766 = vunpack.c.l.b16 %v1606
        %v1767 = vunpack.c.l.b16 %v1607
        %v1768 = vunpack.c.l.b16 %v1608
        %v1769 = vunpack.c.l.b16 %v1609
        %v1770 = vunpack.c.l.b16 %v1610
        %v1771 = vunpack.c.l.b16 %v1611
        %v1772 = vunpack.c.l.b16 %v1612
        %v1773 = vunpack.c.l.b16 %v1613
        %v1774 = vunpack.c.l.b16 %v1614
        %v1775 = vunpack.c.l.b16 %v1615
        %v1776 = vunpack.c.l.b16 %v1616
        %v1777 = vunpack.c.l.b16 %v1617
        %v1778 = vunpack.c.l.b16 %v1618
        %v1779 = vunpack.c.l.b16 %v1619
        %v1780 = vunpack.c.l.b16 %v1620
        %v1781 = vunpack.c.l.b16 %v1621
        %v1782 = vunpack.c.l.b16 %v1622
        %v1783 = vunpack.c.l.b16 %v1623
        %v1784 = vunpack.c.l.b16 %v1624
        %v1785 = vunpack.c.l.b16 %v1625
        %v1786 = vunpack.c.l.b16 %v1626
        %v1787 = vunpack.c.l.b16 %v1627
        %v1788 = vunpack.c.l.b16 %v1628
        %v1789 = vunpack.c.l.b16 %v1629
        %v1790 = vunpack.c.l.b16 %v1630
        %v1791 = vunpack.c.l.b16 %v1631
        %v1792 = vunpack.c.l.b16 %v1632
        %v1793 = vunpack.c.l.b16 %v1633
        %v1794 = vunpack.c.l.b16 %v1634
        %v1795 = vunpack.c.l.b16 %v1635
        %v1796 = vunpack.c.l.b16 %v1636
        %v1797 = vunpack.c.l.b16 %v1637
        %v1798 = vunpack.c.l.b16 %v1638
        %v1799 = vunpack.c.l.b16 %v1639
        %v1800 = vunpack.c.l.b16 %v1640
        %v1801 = vunpack.c.l.b16 %v1641
        %v1802 = vunpack.c.l.b16 %v1642
        %v1803 = vunpack.c.l.b16 %v1643
        %v1804 = vunpack.c.l.b16 %v1644
        %v1805 = vunpack.c.l.b16 %v1645
        %v1806 = vunpack.c.l.b16 %v1646
        %v1807 = vunpack.c.l.b16 %v1647
        %v1808 = vunpack.c.l.b16 %v1648
        %v1809 = vunpack.c.l.b16 %v1649
        %v1810 = vunpack.c.l.b16 %v1650
        %v1811 = vunpack.c.l.b16 %v1651
        %v1812 = vunpack.c.l.b16 %v1652
        %v1813 = vunpack.c.l.b16 %v1653
        %v1814 = vunpack.c.l.b16 %v1654
        %v1815 = vunpack.c.l.b16 %v1655
        %v1816 = vunpack.c.l.b16 %v1656
        %v1817 = vunpack.c.l.b16 %v1657
        %v1818 = vunpack.c.l.b16 %v1658
        %v1819 = vunpack.c.l.b16 %v1659
        %v1820 = vunpack.c.l.b16 %v1660
        %v1821 = vpack.c.b16 %v1742, %v1741
        %v1822 = vpack.c.b16 %v1744, %v1743
        %v1823 = vpack.c.b16 %v1746, %v1745
        %v1824 = vpack.c.b16 %v1748, %v1747
        %v1825 = vpack.c.b16 %v1750, %v1749
        %v1826 = vpack.c.b16 %v1752, %v1751
        %v1827 = vpack.c.b16 %v1754, %v1753
        %v1828 = vpack.c.b16 %v1756, %v1755
        %v1829 = vpack.c.b16 %v1758, %v1757
        %v1830 = vpack.c.b16 %v1760, %v1759
        %v1831 = vpack.c.b16 %v1762, %v1761
        %v1832 = vpack.c.b16 %v1764, %v1763
        %v1833 = vpack.c.b16 %v1766, %v1765
        %v1834 = vpack.c.b16 %v1768, %v1767
        %v1835 = vpack.c.b16 %v1770, %v1769
        %v1836 = vpack.c.b16 %v1772, %v1771
        %v1837 = vpack.c.b16 %v1774, %v1773
        %v1838 = vpack.c.b16 %v1776, %v1775
        %v1839 = vpack.c.b16 %v1778, %v1777
        %v1840 = vpack.c.b16 %v1780, %v1779
        %v1841 = vpack.c.b16 %v1782, %v1781
        %v1842 = vpack.c.b16 %v1784, %v1783
        %v1843 = vpack.c.b16 %v1786, %v1785
        %v1844 = vpack.c.b16 %v1788, %v1787
        %v1845 = vpack.c.b16 %v1790, %v1789
        %v1846 = vpack.c.b16 %v1792, %v1791
        %v1847 = vpack.c.b16 %v1794, %v1793
        %v1848 = vpack.c.b16 %v1796, %v1795
        %v1849 = vpack.c.b16 %v1798, %v1797
        %v1850 = vpack.c.b16 %v1800, %v1799
        %v1851 = vpack.c.b16 %v1802, %v1801
        %v1852 = vpack.c.b16 %v1804, %v1803
        %v1853 = vpack.c.b16 %v1806, %v1805
        %v1854 = vpack.c.b16 %v1808, %v1807
        %v1855 = vpack.c.b16 %v1810, %v1809
        %v1856 = vpack.c.b16 %v1812, %v1811
        %v1857 = vpack.c.b16 %v1814, %v1813
        %v1858 = vpack.c.b16 %v1816, %v1815
        %v1859 = vpack.c.b16 %v1818, %v1817
        %v1860 = vpack.c.b16 %v1820, %v1819
        %1901 = vmatprep.subr.bf16.mxu0 0
        %1902 = vmatpush1.bf16.msra.mxu0 %v1821
        %1903 = vmatprep.subr.bf16.mxu0 0
        %1904 = vmatpush1.bf16.msra.mxu0 %v1822
        %1905 = vmatprep.subr.bf16.mxu0 0
        %1906 = vmatpush1.bf16.msra.mxu0 %v1823
        %1907 = vmatprep.subr.bf16.mxu0 0
        %1908 = vmatpush1.bf16.msra.mxu0 %v1824
        %1909 = vmatprep.subr.bf16.mxu0 0
        %1910 = vmatpush1.bf16.msra.mxu0 %v1825
        %1911 = vmatprep.subr.bf16.mxu0 0
        %1912 = vmatpush1.bf16.msra.mxu0 %v1826
        %1913 = vmatprep.subr.bf16.mxu0 0
        %1914 = vmatpush1.bf16.msra.mxu0 %v1827
        %1915 = vmatprep.subr.bf16.mxu0 0
        %1916 = vmatpush1.bf16.msra.mxu0 %v1828
        %1917 = vmatprep.subr.bf16.mxu0 0
        %1918 = vmatpush1.bf16.msra.mxu0 %v1829
        %1919 = vmatprep.subr.bf16.mxu0 0
        %1920 = vmatpush1.bf16.msra.mxu0 %v1830
        %1921 = vmatprep.subr.bf16.mxu0 0
        %1922 = vmatpush1.bf16.msra.mxu0 %v1831
        %1923 = vmatprep.subr.bf16.mxu0 0
        %1924 = vmatpush1.bf16.msra.mxu0 %v1832
        %1925 = vmatprep.subr.bf16.mxu0 0
        %1926 = vmatpush1.bf16.msra.mxu0 %v1833
        %1927 = vmatprep.subr.bf16.mxu0 0
        %1928 = vmatpush1.bf16.msra.mxu0 %v1834
        %1929 = vmatprep.subr.bf16.mxu0 0
        %1930 = vmatpush1.bf16.msra.mxu0 %v1835
        %1931 = vmatprep.subr.bf16.mxu0 0
        %1932 = vmatpush1.bf16.msra.mxu0 %v1836
        %1933 = vmatprep.mubr.bf16.mxu0 %v1577
        %1934 = vmatmul.mubr.bf16.gmra.mrb[0].mxu0 %v1576
        %v1935 = vpop.f32.mrb[0].mxu0
        %v1936 = vadd.f32 0.0, %v1935
        %v1937 = vpop.f32.mrb[0].mxu0
        %v1938 = vpop.f32.mrb[0].mxu0
        %v1939 = vadd.f32 0.0, %v1938
        %v1940 = vpop.f32.mrb[0].mxu0
        %1941 = vdwg.mxu0
        %1942 = vmatprep.subr.bf16.mxu0 0
        %1943 = vmatpush1.bf16.msra.mxu0 %v1837
        %1944 = vmatprep.subr.bf16.mxu0 0
        %1945 = vmatpush1.bf16.msra.mxu0 %v1838
        %1946 = vmatprep.subr.bf16.mxu0 0
        %1947 = vmatpush1.bf16.msra.mxu0 %v1839
        %1948 = vmatprep.subr.bf16.mxu0 0
        %1949 = vmatpush1.bf16.msra.mxu0 %v1840
        %1950 = vmatprep.subr.bf16.mxu0 0
        %1951 = vmatpush1.bf16.msra.mxu0 %v1841
        %1952 = vmatprep.subr.bf16.mxu0 0
        %1953 = vmatpush1.bf16.msra.mxu0 %v1842
        %1954 = vmatprep.subr.bf16.mxu0 0
        %1955 = vmatpush1.bf16.msra.mxu0 %v1843
        %1956 = vmatprep.subr.bf16.mxu0 0
        %1957 = vmatpush1.bf16.msra.mxu0 %v1844
        %1958 = vmatprep.subr.bf16.mxu0 0
        %1959 = vmatpush1.bf16.msra.mxu0 %v1845
        %1960 = vmatprep.subr.bf16.mxu0 0
        %1961 = vmatpush1.bf16.msra.mxu0 %v1846
        %1962 = vmatprep.subr.bf16.mxu0 0
        %1963 = vmatpush1.bf16.msra.mxu0 %v1847
        %1964 = vmatprep.subr.bf16.mxu0 0
        %1965 = vmatpush1.bf16.msra.mxu0 %v1848
        %1966 = vmatprep.subr.bf16.mxu0 0
        %1967 = vmatpush1.bf16.msra.mxu0 %v1849
        %1968 = vmatprep.subr.bf16.mxu0 0
        %1969 = vmatpush1.bf16.msra.mxu0 %v1850
        %1970 = vmatprep.subr.bf16.mxu0 0
        %1971 = vmatpush1.bf16.msra.mxu0 %v1851
        %1972 = vmatprep.subr.bf16.mxu0 0
        %1973 = vmatpush1.bf16.msra.mxu0 %v1852
        %1974 = vmatprep.mubr.bf16.mxu0 %v1579
        %1975 = vmatmul.mubr.bf16.gmra.mrb[0].mxu0 %v1578
        %v1976 = vpop.f32.mrb[0].mxu0
        %v1977 = vadd.f32 %v1936, %v1976
        %v1978 = vpop.f32.mrb[0].mxu0
        %v1979 = vpop.f32.mrb[0].mxu0
        %v1980 = vadd.f32 %v1939, %v1979
        %v1981 = vpop.f32.mrb[0].mxu0
        %1982 = vdwg.mxu0
        %1983 = vmatprep.subr.bf16.mxu0 0
        %1984 = vmatpush1.bf16.msra.mxu0 %v1853
        %1985 = vmatprep.subr.bf16.mxu0 0
        %1986 = vmatpush1.bf16.msra.mxu0 %v1854
        %1987 = vmatprep.subr.bf16.mxu0 0
        %1988 = vmatpush1.bf16.msra.mxu0 %v1855
        %1989 = vmatprep.subr.bf16.mxu0 0
        %1990 = vmatpush1.bf16.msra.mxu0 %v1856
        %1991 = vmatprep.subr.bf16.mxu0 0
        %1992 = vmatpush1.bf16.msra.mxu0 %v1857
        %1993 = vmatprep.subr.bf16.mxu0 0
        %1994 = vmatpush1.bf16.msra.mxu0 %v1858
        %1995 = vmatprep.subr.bf16.mxu0 0
        %1996 = vmatpush1.bf16.msra.mxu0 %v1859
        %1997 = vmatprep.subr.bf16.mxu0 0
        %1998 = vmatpush1.bf16.msra.mxu0 %v1860
        %1999 = vmatprep.subr.bf16.mxu0 0
        %2000 = vmatpush1.bf16.msra.mxu0 0
        %2001 = vmatprep.subr.bf16.mxu0 0
        %2002 = vmatpush1.bf16.msra.mxu0 0
        %2003 = vmatprep.subr.bf16.mxu0 0
        %2004 = vmatpush1.bf16.msra.mxu0 0
        %2005 = vmatprep.subr.bf16.mxu0 0
        %2006 = vmatpush1.bf16.msra.mxu0 0
        %2007 = vmatprep.subr.bf16.mxu0 0
        %2008 = vmatpush1.bf16.msra.mxu0 0
        %2009 = vmatprep.subr.bf16.mxu0 0
        %2010 = vmatpush1.bf16.msra.mxu0 0
        %2011 = vmatprep.subr.bf16.mxu0 0
        %2012 = vmatpush1.bf16.msra.mxu0 0
        %2013 = vmatprep.subr.bf16.mxu0 0
        %2014 = vmatpush1.bf16.msra.mxu0 0
        %2015 = vmatprep.mubr.bf16.mxu0 0
        %2016 = vmatmul.mubr.bf16.gmra.mrb[0].mxu0 %v1580
        %v2017 = vpop.f32.mrb[0].mxu0
        %v2018 = vadd.f32 %v1977, %v2017
        %v2019 = vpop.f32.mrb[0].mxu0
        %v2020 = vpop.f32.mrb[0].mxu0
        %v2021 = vadd.f32 %v1980, %v2020
        %v2022 = vpop.f32.mrb[0].mxu0
        %2023 = vdwg.mxu0
        %v2024 = vmax.f32 %v2018, 1e-10
        %v2025 = vmax.f32 %v2021, 1e-10
        %v2026 = vlog2.pop %v2024
        %v2027 = vmul.f32 %v2026, 0.6931472
        %v2028 = vlog2.pop %v2025
        %v2029 = vmul.f32 %v2028, 0.6931472
        %v2030 = vpack.c.bf16 %v2029, %v2027
        %v2031 = vld [vmem:[#allocation8] sm:$0xf]
        %v2032 = vld [vmem:[#allocation8 + $0x4] sm:$0xf]
        %v2033 = vld [vmem:[#allocation8 + $0x8] sm:$0xf]
        %v2034 = vld [vmem:[#allocation8 + $0xc] sm:$0xf]
        %v2035 = vld [vmem:[#allocation8 + $0x10] sm:$0xf]
        %v2036 = vld [vmem:[#allocation8 + $0x14] sm:$0xf]
        %v2037 = vld [vmem:[#allocation8 + $0x18] sm:$0xf]
        %v2038 = vld [vmem:[#allocation8 + $0x1c] sm:$0xf]
        %v2039 = vld [vmem:[#allocation8 + $0x20] sm:$0xf]
        %v2040 = vld [vmem:[#allocation8 + $0x24] sm:$0xf]
        %v2041 = vld [vmem:[#allocation8 + $0x28] sm:$0xf]
        %v2042 = vld [vmem:[#allocation8 + $0x2c] sm:$0xf]
        %v2043 = vld [vmem:[#allocation8 + $0x30] sm:$0xf]
        %v2044 = vld [vmem:[#allocation8 + $0x34] sm:$0xf]
        %v2045 = vld [vmem:[#allocation8 + $0x38] sm:$0xf]
        %v2046 = vld [vmem:[#allocation8 + $0x3c] sm:$0xf]
        %v2063 = vunpack.c.l.b16 %v2031
        %v2064 = vunpack.c.l.b16 %v2032
        %v2065 = vunpack.c.l.b16 %v2033
        %v2066 = vunpack.c.l.b16 %v2034
        %v2067 = vunpack.c.l.b16 %v2035
        %v2068 = vunpack.c.l.b16 %v2036
        %v2069 = vunpack.c.l.b16 %v2037
        %v2070 = vunpack.c.l.b16 %v2038
        %v2071 = vunpack.c.l.b16 %v2039
        %v2072 = vunpack.c.l.b16 %v2040
        %v2073 = vunpack.c.l.b16 %v2041
        %v2074 = vunpack.c.l.b16 %v2042
        %v2075 = vunpack.c.l.b16 %v2043
        %v2076 = vunpack.c.l.b16 %v2044
        %v2077 = vunpack.c.l.b16 %v2045
        %v2078 = vunpack.c.l.b16 %v2046
        %v2079 = vpack.c.b16 %v2064, %v2063
        %v2080 = vpack.c.b16 %v2066, %v2065
        %v2081 = vpack.c.b16 %v2068, %v2067
        %v2082 = vpack.c.b16 %v2070, %v2069
        %v2083 = vpack.c.b16 %v2072, %v2071
        %v2084 = vpack.c.b16 %v2074, %v2073
        %v2085 = vpack.c.b16 %v2076, %v2075
        %v2086 = vpack.c.b16 %v2078, %v2077
        %2095 = vmatprep.subr.bf16.mxu0 0
        %2096 = vmatpush1.bf16.msra.mxu0 %v2079
        %2097 = vmatprep.subr.bf16.mxu0 0
        %2098 = vmatpush1.bf16.msra.mxu0 %v2080
        %2099 = vmatprep.subr.bf16.mxu0 0
        %2100 = vmatpush1.bf16.msra.mxu0 %v2081
        %2101 = vmatprep.subr.bf16.mxu0 0
        %2102 = vmatpush1.bf16.msra.mxu0 %v2082
        %2103 = vmatprep.subr.bf16.mxu0 0
        %2104 = vmatpush1.bf16.msra.mxu0 %v2083
        %2105 = vmatprep.subr.bf16.mxu0 0
        %2106 = vmatpush1.bf16.msra.mxu0 %v2084
        %2107 = vmatprep.subr.bf16.mxu0 0
        %2108 = vmatpush1.bf16.msra.mxu0 %v2085
        %2109 = vmatprep.subr.bf16.mxu0 0
        %2110 = vmatpush1.bf16.msra.mxu0 %v2086
        %2111 = vmatprep.subr.bf16.mxu0 0
        %2112 = vmatpush1.bf16.msra.mxu0 0
        %2113 = vmatprep.subr.bf16.mxu0 0
        %2114 = vmatpush1.bf16.msra.mxu0 0
        %2115 = vmatprep.subr.bf16.mxu0 0
        %2116 = vmatpush1.bf16.msra.mxu0 0
        %2117 = vmatprep.subr.bf16.mxu0 0
        %2118 = vmatpush1.bf16.msra.mxu0 0
        %2119 = vmatprep.subr.bf16.mxu0 0
        %2120 = vmatpush1.bf16.msra.mxu0 0
        %2121 = vmatprep.subr.bf16.mxu0 0
        %2122 = vmatpush1.bf16.msra.mxu0 0
        %2123 = vmatprep.subr.bf16.mxu0 0
        %2124 = vmatpush1.bf16.msra.mxu0 0
        %2125 = vmatprep.subr.bf16.mxu0 0
        %2126 = vmatpush1.bf16.msra.mxu0 0
        %2127 = vmatprep.mubr.bf16.mxu0 0
        %2128 = vmatmul.mubr.bf16.gmra.mrb[0].mxu0 %v2030
        %v2129 = vpop.f32.mrb[0].mxu0
        %v2130 = vadd.f32 0.0, %v2129
        %v2131 = vpop.f32.mrb[0].mxu0
        %v2132 = vpop.f32.mrb[0].mxu0
        %v2133 = vadd.f32 0.0, %v2132
        %v2134 = vpop.f32.mrb[0].mxu0
        %2135 = vdwg.mxu0
        %2136 = vst [vmem:[%s260] sm:$0xff] %v2130
        %2137 = vst [vmem:[%s260 + $0x8] sm:$0xff] %v2133
        %s2138 = sand.u32 %s120, 1
        %s2139 = scalar_lea.sflag [#allocation4], %s2138
        %s2140 = sand.u32 %s120, 1
        %s2141 = smul.addr %s2140, 16
        %s2142 = scalar_lea.vmem [#allocation10], %s2141
        // Predicated region
        $region53: #{tpu_custom_call.1} parent=35 // pred_check
          %p2143 = pneg %p130
        $region54: #{tpu_custom_call.1} parent=35 // pred_check_branch
          %2145 = sbr.rel (%p2143) target = $region56
        $region55: #{tpu_custom_call.1} parent=35 // pred_region
          %s2146 = smul.u32 2, %s23
          %s2148 = ssub.s32 256, 256
          %2149 = vsyncadd %s2139, %s2148
          %s2150 = smul.addr %s2146, 128
          %s2151 = scalar_lea.hbm %s4, %s2150
          %s2152 = sshll.u32 %s2142, 4
          %s2153 = int_to_ptr.vmem [resolvable:$true] %s2152
          %2158 = dma.vmem_to_hbm [thread:$0]  %s2153, 256, %s2151, %s2139, 128, 128, 8
        $region56: #{tpu_custom_call.1} parent=35 // pred_fallthru
          _
      $region36: #{tpu_custom_call.1} parent=5 // pred_fallthru
        _
      %p2159 = scmp.le.s32.totalorder 2, %s18
      // Predicated region
      $region57: #{tpu_custom_call.1} parent=5 // pred_check
        %p2160 = pneg %p2159
      $region58: #{tpu_custom_call.1} parent=5 // pred_check_branch
        %2162 = sbr.rel (%p2160) target = $region60
      $region59: #{tpu_custom_call.1} parent=5 // pred_region
        %s2163 = ssub.s32 %s18, 2
        // Predicated region
        $region61: #{tpu_custom_call.1} parent=59 // pred_check
          %p2164 = pneg %p136
        $region62: #{tpu_custom_call.1} parent=59 // pred_check_branch
          %2166 = sbr.rel (%p2164) target = $region64
        $region63: #{tpu_custom_call.1} parent=59 // pred_region
          %s2167 = sand.u32 %s121, 1
          %s2168 = scalar_lea.sflag [#allocation4], %s2167
          %s2169 = sand.u32 %s121, 1
          %s2170 = smul.addr %s2169, 16
          %s2171 = scalar_lea.vmem [#allocation10], %s2170
          %2172 = dma.done %s2168, 256
        $region64: #{tpu_custom_call.1} parent=59 // pred_fallthru
          _
      $region60: #{tpu_custom_call.1} parent=5 // pred_fallthru
        _
    $region6: #{tpu_custom_call.1} parent=1 // loop_footer
      %s22 = sadd.s32 1, %s18
    $region7: #{tpu_custom_call.1} parent=1 // loop_footer_branch
      %17 = sbr.rel target = $region3
    $region8: #{tpu_custom_call.1} parent=1 // loop_exit
      _
    %2173 = vsyncpa [#allocation3], 1
    %s2174 = scalar_lea.sflag [#allocation3], 1
    %2175 = vsyncpa %s2174, 1
    %2176 = vsyncpa [#allocation6], 1
    %2177 = vsyncpa [#allocation9], 1
    %2178 = vsyncpa [#allocation4], 1
    %s2179 = scalar_lea.sflag [#allocation4], 1
    %2180 = vsyncpa %s2179, 1

</llo_original>
